<compile_context>
chip_gen: v7x
topology: tpu7x:2x2x1
jax: 0.10.0
libtpu: 0.0.40
codegen_flags: <defaults>
</compile_context>

<pallas_src>
import functools
from typing import NamedTuple

import jax
import jax.numpy as jnp
from jax import lax
from jax.experimental import pallas as pl
from jax.experimental.pallas import tpu as pltpu

EPS = 1e-5
KH, KW = 5, 3       # conv kernel size of both stages
POOL = 3            # MaxPool2d((3, 1)) window / stride along H


class EncoderDims(NamedTuple):
    Ho1: int   # conv1 output height
    Wo1: int   # conv1 output width
    Hp1: int   # height after pool1
    Ho2: int   # conv2 output height
    Wo2: int   # conv2 output width
    Hp2: int   # height after pool2
    C1: int
    C2: int
    K1: int    # stage-1 im2col contraction size = KH * W_in
    L1: int    # stage-1 activation lanes = Wo1 * C1
    L2: int    # stage-2 activation lanes = C2 * Wo2


def encoder_dims(H_in, W_in, C1, C2):
    Ho1, Wo1 = H_in - KH + 1, W_in - KW + 1
    Hp1 = Ho1 // POOL
    Ho2, Wo2 = Hp1 - KH + 1, Wo1 - KW + 1
    Hp2 = Ho2 // POOL
    return EncoderDims(Ho1, Wo1, Hp1, Ho2, Wo2, Hp2, C1, C2,
                       KH * W_in, Wo1 * C1, C2 * Wo2)


# --------------------------------- kernel ------------------------------------
def _make_fused_kernel(d: EncoderDims):
    rows2 = d.Hp2 * POOL          # only conv2 rows that survive the second pool

    def kernel(x_ref, w1_ref, p1_ref, w2_ref, p2_ref, o_ref, a1_scr):
        # ------------- stage 1: conv1 (BN folded) + PReLU + MaxPool((3,1)) ---
        t1, a1 = p1_ref[0:1, :], p1_ref[1:2, :]

        def phase(k):
            # (Hp1, K1) @ (K1, L1); rows of phase k are conv-output rows 3*i+k.
            h = jnp.dot(x_ref[0, k], w1_ref[...],
                        preferred_element_type=jnp.float32)
            h = h + t1                              # conv-bias + BN shift
            return jnp.where(h >= 0.0, h, a1 * h)   # PReLU (per-channel slope)

        # MaxPool2d((3,1)) == elementwise max of the three phases (pure VPU).
        act1 = jnp.maximum(jnp.maximum(phase(0), phase(1)), phase(2))
        a1_scr[...] = act1                          # stage-1 act stays in VMEM

        # ------------- stage 2: conv2 (BN folded) + PReLU + MaxPool((3,1)) ---
        t2, a2 = p2_ref[0:1, :], p2_ref[1:2, :]
        h2 = jnp.dot(a1_scr[pl.ds(0, rows2), :], w2_ref[0],
                     preferred_element_type=jnp.float32)
        for dh in range(1, KH):
            h2 = h2 + jnp.dot(a1_scr[pl.ds(dh, rows2), :], w2_ref[dh],
                              preferred_element_type=jnp.float32)
        h2 = h2 + t2
        h2 = jnp.where(h2 >= 0.0, h2, a2 * h2)

        # MaxPool((3,1)): elementwise max of three row slices per output row.
        rows = []
        for i in range(d.Hp2):
            r = jnp.maximum(jnp.maximum(h2[POOL * i:POOL * i + 1, :],
                                        h2[POOL * i + 1:POOL * i + 2, :]),
                            h2[POOL * i + 2:POOL * i + 3, :])
            rows.append(r)
        pooled2 = rows[0] if d.Hp2 == 1 else jnp.concatenate(rows, axis=0)
        o_ref[0] = pooled2.astype(o_ref.dtype)

    return kernel


# --------------------------------- wrapper -----------------------------------
@functools.partial(jax.jit, static_argnames=("dims",))
def encoder_forward_pallas(x_nchw, W1, p1pack, W2, p2pack, dims: EncoderDims):
    d = dims
    N, _, H_in, W_in = x_nchw.shape
    # Cin == 1: NCHW -> (N, H, W) is a pure reshape (no transpose needed).
    x = x_nchw.reshape(N, H_in, W_in).astype(jnp.float32)

    # Stage-1 im2col (a few KiB, built once in XLA), pre-split into the 3
    # maxpool phases so the in-kernel pooling is a pure elementwise max.
    cols = jnp.concatenate([x[:, dh:dh + d.Ho1, :] for dh in range(KH)],
                           axis=-1)                              # (N, Ho1, K1)
    x1p = cols[:, :d.Hp1 * POOL, :]
    x1p = x1p.reshape(N, d.Hp1, POOL, d.K1).transpose(0, 2, 1, 3)  # (N,3,Hp1,K1)

    out = pl.pallas_call(
        _make_fused_kernel(d),
        out_shape=jax.ShapeDtypeStruct((N, d.Hp2, d.L2), jnp.float32),
        grid=(N,),
        in_specs=[
            pl.BlockSpec((1, POOL, d.Hp1, d.K1), lambda n: (n, 0, 0, 0)),
            pl.BlockSpec((d.K1, d.L1), lambda n: (0, 0)),
            pl.BlockSpec((2, d.L1), lambda n: (0, 0)),
            pl.BlockSpec((KH, d.L1, d.L2), lambda n: (0, 0, 0)),
            pl.BlockSpec((2, d.L2), lambda n: (0, 0)),
        ],
        out_specs=pl.BlockSpec((1, d.Hp2, d.L2), lambda n: (n, 0, 0)),
        scratch_shapes=[pltpu.VMEM((d.Hp1, d.L1), jnp.float32)],
        compiler_params=pltpu.CompilerParams(
            dimension_semantics=("parallel",)),
    )(x1p, W1, p1pack, W2, p2pack)

    # Lane order is (c_out major, w_out minor): x.view(N, C, -1) is a reshape.
    out = out.reshape(N, d.Hp2, d.C2, d.Wo2)
    if d.Hp2 > 1:
        out = jnp.transpose(out, (0, 2, 1, 3))
    return out.reshape(N, d.C2, d.Hp2 * d.Wo2)


# ----------------------------- parameter prep --------------------------------
def _fuse_bn(p):
    """Fold conv-bias + BatchNorm(eval) into per-channel (scale, shift)."""
    scale = p["gamma"] / jnp.sqrt(p["var"] + EPS)
    shift = (p["b"] - p["mean"]) * scale + p["beta"]
    return scale, shift


def prepare_params(p1, p2, H_in, W_in):
    """Build kernel-ready packed weights from PyTorch-layout parameters."""
    C1, C2 = p1["w"].shape[0], p2["w"].shape[0]
    d = encoder_dims(H_in, W_in, C1, C2)

    # Stage-1: one (KH*W_in, Wo1*C1) im2col weight; the KW taps are folded into
    # a banded structure over the input-W coordinate.  Lane order (wo major, c minor).
    w1 = jnp.transpose(p1["w"][:, 0], (1, 2, 0))            # (KH, KW, C1)
    W1 = jnp.zeros((KH, W_in, d.Wo1, C1), jnp.float32)
    for wo in range(d.Wo1):
        for dw in range(KW):
            W1 = W1.at[:, wo + dw, wo, :].set(w1[:, dw, :])
    W1 = W1.reshape(d.K1, d.L1)

    # Stage-2: one banded (Wo1*C1, C2*Wo2) matrix per KH tap; output lane order
    # is (c_out major, w_out minor) so the final view() is a pure reshape.
    w2 = jnp.transpose(p2["w"], (2, 3, 1, 0))               # (KH, KW, C1, C2)
    W2 = jnp.zeros((KH, d.Wo1, C1, C2, d.Wo2), jnp.float32)
    for wo in range(d.Wo2):
        for dw in range(KW):
            W2 = W2.at[:, wo + dw, :, :, wo].set(w2[:, dw, :, :])
    W2 = W2.reshape(KH, d.L1, d.L2)

    # Fold BN(eval) scale directly into the weight columns; pack per-lane
    # shift + PReLU slope as one (2, lanes) array per stage.
    s1, t1 = _fuse_bn(p1)
    s2, t2 = _fuse_bn(p2)
    s1_lane = jnp.tile(s1, d.Wo1)                            # lane = wo*C1 + c
    s2_lane = jnp.repeat(s2, d.Wo2)                          # lane = c2*Wo2 + wo
    W1 = W1 * s1_lane[None, :]
    W2 = W2 * s2_lane[None, None, :]
    p1pack = jnp.stack([jnp.tile(t1, d.Wo1),
                        jnp.tile(p1["alpha"], d.Wo1)])       # (2, L1)
    p2pack = jnp.stack([jnp.repeat(t2, d.Wo2),
                        jnp.repeat(p2["alpha"], d.Wo2)])     # (2, L2)
    return W1, p1pack, W2, p2pack, d


def make_stage_params(key, cin, cout, kh=KH, kw=KW):
    """Random parameters in PyTorch layout: conv weight (Cout, Cin, KH, KW)."""
    ks = jax.random.split(key, 7)
    w = (jax.random.normal(ks[0], (cout, cin, kh, kw), jnp.float32)
         * (1.0 / jnp.sqrt(kh * kw * cin)))
    b = 0.1 * jax.random.normal(ks[1], (cout,), jnp.float32)
    gamma = 1.0 + 0.1 * jax.random.normal(ks[2], (cout,), jnp.float32)
    beta = 0.1 * jax.random.normal(ks[3], (cout,), jnp.float32)
    mean = 0.1 * jax.random.normal(ks[4], (cout,), jnp.float32)
    var = 0.5 + jax.random.uniform(ks[5], (cout,), jnp.float32)
    alpha = 0.25 * jnp.ones((cout,), jnp.float32)             # PReLU default
    return dict(w=w, b=b, gamma=gamma, beta=beta, mean=mean, var=var,
                alpha=alpha)


# ----------------------------- pure-JAX reference ----------------------------
def _ref_stage(x_nhwc, p):
    w_hwio = jnp.transpose(p["w"], (2, 3, 1, 0))
    y = lax.conv_general_dilated(
        x_nhwc, w_hwio, window_strides=(1, 1), padding="VALID",
        dimension_numbers=("NHWC", "HWIO", "NHWC")) + p["b"]
    y = (y - p["mean"]) / jnp.sqrt(p["var"] + EPS) * p["gamma"] + p["beta"]
    y = jnp.where(y >= 0, y, p["alpha"] * y)
    N, Hc, Wc, C = y.shape
    Hp = Hc // POOL
    return y[:, :Hp * POOL].reshape(N, Hp, POOL, Wc, C).max(axis=2)


def encoder_forward_ref(x_nchw, p1, p2):
    x = jnp.transpose(x_nchw, (0, 2, 3, 1)).astype(jnp.float32)
    h = _ref_stage(_ref_stage(x, p1), p2)
    h = jnp.transpose(h, (0, 3, 1, 2))
    return h.reshape(h.shape[0], h.shape[1], -1)


# ------------------------------------ main ------------------------------------
if __name__ == "__main__":
    key = jax.random.PRNGKey(0)
    kx, k1, k2 = jax.random.split(key, 3)

    dims = 32
    N, H_in, W_in = 2, 32, 8                 # small EMG-like input (N, 1, H, W)
    x_nchw = jax.random.normal(kx, (N, 1, H_in, W_in), jnp.float32)

    p1 = make_stage_params(k1, 1, dims)
    p2 = make_stage_params(k2, dims, 2 * dims)

    W1, p1pack, W2, p2pack, d = prepare_params(p1, p2, H_in, W_in)

    out = encoder_forward_pallas(x_nchw, W1, p1pack, W2, p2pack, dims=d)
    out = jax.block_until_ready(out)

    ref = jax.block_until_ready(encoder_forward_ref(x_nchw, p1, p2))
    assert out.shape == ref.shape, (out.shape, ref.shape)
    err = float(jnp.max(jnp.abs(out - ref)))
    assert err < 1e-4, f"max abs error {err}"

    print("KERNEL_OK")
</pallas_src>

<mosaic_0001>
module attributes {stable_mosaic.version = 11 : i64} {
  func.func @kernel(%arg0: i32, %arg1: memref<1x3x9x40xf32, #tpu.memory_space<vmem>>, %arg2: memref<40x192xf32, #tpu.memory_space<vmem>>, %arg3: memref<2x192xf32, #tpu.memory_space<vmem>>, %arg4: memref<5x192x256xf32, #tpu.memory_space<vmem>>, %arg5: memref<2x256xf32, #tpu.memory_space<vmem>>, %arg6: memref<1x1x256xf32, #tpu.memory_space<vmem>>, %arg7: memref<9x192xf32, #tpu.memory_space<vmem>>) attributes {dimension_semantics = [#tpu.dimension_semantics<parallel>], iteration_bounds = array<i64: 2>, scalar_prefetch = 0 : i64, scratch_operands = 1 : i64, tpu.core_type = #tpu.core_type<tc>, window_params = [{transform_indices = @transform_0, window_bounds = array<i64: 1, 3, 9, 40>}, {pipeline_mode = #tpu.pipeline_mode<synchronous>, transform_indices = @transform_1, window_bounds = array<i64: 40, 192>}, {pipeline_mode = #tpu.pipeline_mode<synchronous>, transform_indices = @transform_2, window_bounds = array<i64: 2, 192>}, {pipeline_mode = #tpu.pipeline_mode<synchronous>, transform_indices = @transform_3, window_bounds = array<i64: 5, 192, 256>}, {pipeline_mode = #tpu.pipeline_mode<synchronous>, transform_indices = @transform_4, window_bounds = array<i64: 2, 256>}, {transform_indices = @transform_5, window_bounds = array<i64: 1, 1, 256>}]} {
    %c0 = arith.constant 0 : index
    %c0_0 = arith.constant 0 : index
    %0 = vector.load %arg3[%c0, %c0_0] : memref<2x192xf32, #tpu.memory_space<vmem>>, vector<1x192xf32>
    %c1 = arith.constant 1 : index
    %c0_1 = arith.constant 0 : index
    %1 = vector.load %arg3[%c1, %c0_1] : memref<2x192xf32, #tpu.memory_space<vmem>>, vector<1x192xf32>
    %c0_2 = arith.constant 0 : index
    %c0_3 = arith.constant 0 : index
    %c0_4 = arith.constant 0 : index
    %c0_5 = arith.constant 0 : index
    %2 = vector.load %arg1[%c0_2, %c0_3, %c0_4, %c0_5] : memref<1x3x9x40xf32, #tpu.memory_space<vmem>>, vector<1x1x9x40xf32>
    %3 = vector.shape_cast %2 : vector<1x1x9x40xf32> to vector<9x40xf32>
    %c0_6 = arith.constant 0 : index
    %c0_7 = arith.constant 0 : index
    %4 = vector.load %arg2[%c0_6, %c0_7] : memref<40x192xf32, #tpu.memory_space<vmem>>, vector<40x192xf32>
    %cst = arith.constant dense<0.000000e+00> : vector<9x192xf32>
    %5 = tpu.matmul %3, %4, %cst {dimension_numbers = #tpu.dot_dimension_numbers<[1], [0], [0], [1], [0, 0, 1, 1], [], []>} : vector<9x40xf32>, vector<40x192xf32>, vector<9x192xf32> -> vector<9x192xf32>
    %6 = vector.broadcast %0 : vector<1x192xf32> to vector<9x192xf32>
    %7 = arith.addf %5, %6 : vector<9x192xf32>
    %cst_8 = arith.constant 0.000000e+00 : f32
    %8 = vector.broadcast %cst_8 : f32 to vector<9x192xf32>
    %9 = arith.cmpf oge, %7, %8 : vector<9x192xf32>
    %10 = vector.broadcast %1 : vector<1x192xf32> to vector<9x192xf32>
    %11 = arith.mulf %10, %7 : vector<9x192xf32>
    %12 = arith.select %9, %7, %11 : vector<9x192xi1>, vector<9x192xf32>
    %c0_9 = arith.constant 0 : index
    %c1_10 = arith.constant 1 : index
    %c0_11 = arith.constant 0 : index
    %c0_12 = arith.constant 0 : index
    %13 = vector.load %arg1[%c0_9, %c1_10, %c0_11, %c0_12] : memref<1x3x9x40xf32, #tpu.memory_space<vmem>>, vector<1x1x9x40xf32>
    %14 = vector.shape_cast %13 : vector<1x1x9x40xf32> to vector<9x40xf32>
    %c0_13 = arith.constant 0 : index
    %c0_14 = arith.constant 0 : index
    %15 = vector.load %arg2[%c0_13, %c0_14] : memref<40x192xf32, #tpu.memory_space<vmem>>, vector<40x192xf32>
    %cst_15 = arith.constant dense<0.000000e+00> : vector<9x192xf32>
    %16 = tpu.matmul %14, %15, %cst_15 {dimension_numbers = #tpu.dot_dimension_numbers<[1], [0], [0], [1], [0, 0, 1, 1], [], []>} : vector<9x40xf32>, vector<40x192xf32>, vector<9x192xf32> -> vector<9x192xf32>
    %17 = vector.broadcast %0 : vector<1x192xf32> to vector<9x192xf32>
    %18 = arith.addf %16, %17 : vector<9x192xf32>
    %cst_16 = arith.constant 0.000000e+00 : f32
    %19 = vector.broadcast %cst_16 : f32 to vector<9x192xf32>
    %20 = arith.cmpf oge, %18, %19 : vector<9x192xf32>
    %21 = vector.broadcast %1 : vector<1x192xf32> to vector<9x192xf32>
    %22 = arith.mulf %21, %18 : vector<9x192xf32>
    %23 = arith.select %20, %18, %22 : vector<9x192xi1>, vector<9x192xf32>
    %24 = arith.maximumf %12, %23 : vector<9x192xf32>
    %c0_17 = arith.constant 0 : index
    %c2 = arith.constant 2 : index
    %c0_18 = arith.constant 0 : index
    %c0_19 = arith.constant 0 : index
    %25 = vector.load %arg1[%c0_17, %c2, %c0_18, %c0_19] : memref<1x3x9x40xf32, #tpu.memory_space<vmem>>, vector<1x1x9x40xf32>
    %26 = vector.shape_cast %25 : vector<1x1x9x40xf32> to vector<9x40xf32>
    %c0_20 = arith.constant 0 : index
    %c0_21 = arith.constant 0 : index
    %27 = vector.load %arg2[%c0_20, %c0_21] : memref<40x192xf32, #tpu.memory_space<vmem>>, vector<40x192xf32>
    %cst_22 = arith.constant dense<0.000000e+00> : vector<9x192xf32>
    %28 = tpu.matmul %26, %27, %cst_22 {dimension_numbers = #tpu.dot_dimension_numbers<[1], [0], [0], [1], [0, 0, 1, 1], [], []>} : vector<9x40xf32>, vector<40x192xf32>, vector<9x192xf32> -> vector<9x192xf32>
    %29 = vector.broadcast %0 : vector<1x192xf32> to vector<9x192xf32>
    %30 = arith.addf %28, %29 : vector<9x192xf32>
    %cst_23 = arith.constant 0.000000e+00 : f32
    %31 = vector.broadcast %cst_23 : f32 to vector<9x192xf32>
    %32 = arith.cmpf oge, %30, %31 : vector<9x192xf32>
    %33 = vector.broadcast %1 : vector<1x192xf32> to vector<9x192xf32>
    %34 = arith.mulf %33, %30 : vector<9x192xf32>
    %35 = arith.select %32, %30, %34 : vector<9x192xi1>, vector<9x192xf32>
    %36 = arith.maximumf %24, %35 : vector<9x192xf32>
    %c0_24 = arith.constant 0 : index
    %c0_25 = arith.constant 0 : index
    %37 = vector.load %arg7[%c0_24, %c0_25] : memref<9x192xf32, #tpu.memory_space<vmem>>, vector<9x192xf32>
    tpu.vector_store %arg7[%c0_24, %c0_25], %36 {strides = array<i32>} : memref<9x192xf32, #tpu.memory_space<vmem>>, vector<9x192xf32>,
    %c0_26 = arith.constant 0 : index
    %c0_27 = arith.constant 0 : index
    %38 = vector.load %arg5[%c0_26, %c0_27] : memref<2x256xf32, #tpu.memory_space<vmem>>, vector<1x256xf32>
    %c1_28 = arith.constant 1 : index
    %c0_29 = arith.constant 0 : index
    %39 = vector.load %arg5[%c1_28, %c0_29] : memref<2x256xf32, #tpu.memory_space<vmem>>, vector<1x256xf32>
    %c0_30 = arith.constant 0 : index
    %c0_31 = arith.constant 0 : index
    %40 = vector.load %arg7[%c0_30, %c0_31] : memref<9x192xf32, #tpu.memory_space<vmem>>, vector<3x192xf32>
    %c0_32 = arith.constant 0 : index
    %c0_33 = arith.constant 0 : index
    %c0_34 = arith.constant 0 : index
    %41 = vector.load %arg4[%c0_32, %c0_33, %c0_34] : memref<5x192x256xf32, #tpu.memory_space<vmem>>, vector<1x192x256xf32>
    %42 = vector.shape_cast %41 : vector<1x192x256xf32> to vector<192x256xf32>
    %cst_35 = arith.constant dense<0.000000e+00> : vector<3x256xf32>
    %43 = tpu.matmul %40, %42, %cst_35 {dimension_numbers = #tpu.dot_dimension_numbers<[1], [0], [0], [1], [0, 0, 1, 1], [], []>} : vector<3x192xf32>, vector<192x256xf32>, vector<3x256xf32> -> vector<3x256xf32>
    %c1_36 = arith.constant 1 : index
    %c0_37 = arith.constant 0 : index
    %44 = vector.load %arg7[%c1_36, %c0_37] : memref<9x192xf32, #tpu.memory_space<vmem>>, vector<3x192xf32>
    %c1_38 = arith.constant 1 : index
    %c0_39 = arith.constant 0 : index
    %c0_40 = arith.constant 0 : index
    %45 = vector.load %arg4[%c1_38, %c0_39, %c0_40] : memref<5x192x256xf32, #tpu.memory_space<vmem>>, vector<1x192x256xf32>
    %46 = vector.shape_cast %45 : vector<1x192x256xf32> to vector<192x256xf32>
    %cst_41 = arith.constant dense<0.000000e+00> : vector<3x256xf32>
    %47 = tpu.matmul %44, %46, %cst_41 {dimension_numbers = #tpu.dot_dimension_numbers<[1], [0], [0], [1], [0, 0, 1, 1], [], []>} : vector<3x192xf32>, vector<192x256xf32>, vector<3x256xf32> -> vector<3x256xf32>
    %48 = arith.addf %43, %47 : vector<3x256xf32>
    %c2_42 = arith.constant 2 : index
    %c0_43 = arith.constant 0 : index
    %49 = vector.load %arg7[%c2_42, %c0_43] : memref<9x192xf32, #tpu.memory_space<vmem>>, vector<3x192xf32>
    %c2_44 = arith.constant 2 : index
    %c0_45 = arith.constant 0 : index
    %c0_46 = arith.constant 0 : index
    %50 = vector.load %arg4[%c2_44, %c0_45, %c0_46] : memref<5x192x256xf32, #tpu.memory_space<vmem>>, vector<1x192x256xf32>
    %51 = vector.shape_cast %50 : vector<1x192x256xf32> to vector<192x256xf32>
    %cst_47 = arith.constant dense<0.000000e+00> : vector<3x256xf32>
    %52 = tpu.matmul %49, %51, %cst_47 {dimension_numbers = #tpu.dot_dimension_numbers<[1], [0], [0], [1], [0, 0, 1, 1], [], []>} : vector<3x192xf32>, vector<192x256xf32>, vector<3x256xf32> -> vector<3x256xf32>
    %53 = arith.addf %48, %52 : vector<3x256xf32>
    %c3 = arith.constant 3 : index
    %c0_48 = arith.constant 0 : index
    %54 = vector.load %arg7[%c3, %c0_48] : memref<9x192xf32, #tpu.memory_space<vmem>>, vector<3x192xf32>
    %c3_49 = arith.constant 3 : index
    %c0_50 = arith.constant 0 : index
    %c0_51 = arith.constant 0 : index
    %55 = vector.load %arg4[%c3_49, %c0_50, %c0_51] : memref<5x192x256xf32, #tpu.memory_space<vmem>>, vector<1x192x256xf32>
    %56 = vector.shape_cast %55 : vector<1x192x256xf32> to vector<192x256xf32>
    %cst_52 = arith.constant dense<0.000000e+00> : vector<3x256xf32>
    %57 = tpu.matmul %54, %56, %cst_52 {dimension_numbers = #tpu.dot_dimension_numbers<[1], [0], [0], [1], [0, 0, 1, 1], [], []>} : vector<3x192xf32>, vector<192x256xf32>, vector<3x256xf32> -> vector<3x256xf32>
    %58 = arith.addf %53, %57 : vector<3x256xf32>
    %c4 = arith.constant 4 : index
    %c0_53 = arith.constant 0 : index
    %59 = vector.load %arg7[%c4, %c0_53] : memref<9x192xf32, #tpu.memory_space<vmem>>, vector<3x192xf32>
    %c4_54 = arith.constant 4 : index
    %c0_55 = arith.constant 0 : index
    %c0_56 = arith.constant 0 : index
    %60 = vector.load %arg4[%c4_54, %c0_55, %c0_56] : memref<5x192x256xf32, #tpu.memory_space<vmem>>, vector<1x192x256xf32>
    %61 = vector.shape_cast %60 : vector<1x192x256xf32> to vector<192x256xf32>
    %cst_57 = arith.constant dense<0.000000e+00> : vector<3x256xf32>
    %62 = tpu.matmul %59, %61, %cst_57 {dimension_numbers = #tpu.dot_dimension_numbers<[1], [0], [0], [1], [0, 0, 1, 1], [], []>} : vector<3x192xf32>, vector<192x256xf32>, vector<3x256xf32> -> vector<3x256xf32>
    %63 = arith.addf %58, %62 : vector<3x256xf32>
    %64 = vector.broadcast %38 : vector<1x256xf32> to vector<3x256xf32>
    %65 = arith.addf %63, %64 : vector<3x256xf32>
    %cst_58 = arith.constant 0.000000e+00 : f32
    %66 = vector.broadcast %cst_58 : f32 to vector<3x256xf32>
    %67 = arith.cmpf oge, %65, %66 : vector<3x256xf32>
    %68 = vector.broadcast %39 : vector<1x256xf32> to vector<3x256xf32>
    %69 = arith.mulf %68, %65 : vector<3x256xf32>
    %70 = arith.select %67, %65, %69 : vector<3x256xi1>, vector<3x256xf32>
    %71 = vector.extract_strided_slice %70 {offsets = [0, 0], sizes = [1, 256], strides = [1, 1]} : vector<3x256xf32> to vector<1x256xf32>
    %72 = vector.extract_strided_slice %70 {offsets = [1, 0], sizes = [1, 256], strides = [1, 1]} : vector<3x256xf32> to vector<1x256xf32>
    %73 = arith.maximumf %71, %72 : vector<1x256xf32>
    %74 = vector.extract_strided_slice %70 {offsets = [2, 0], sizes = [1, 256], strides = [1, 1]} : vector<3x256xf32> to vector<1x256xf32>
    %75 = arith.maximumf %73, %74 : vector<1x256xf32>
    %c0_59 = arith.constant 0 : index
    %c0_60 = arith.constant 0 : index
    %c0_61 = arith.constant 0 : index
    %76 = vector.load %arg6[%c0_59, %c0_60, %c0_61] : memref<1x1x256xf32, #tpu.memory_space<vmem>>, vector<1x1x256xf32>
    %77 = vector.shape_cast %76 : vector<1x1x256xf32> to vector<1x256xf32>
    %78 = vector.shape_cast %75 : vector<1x256xf32> to vector<1x1x256xf32>
    tpu.vector_store %arg6[%c0_59, %c0_60, %c0_61], %78 {strides = array<i32>} : memref<1x1x256xf32, #tpu.memory_space<vmem>>, vector<1x1x256xf32>,
    return
  }
  func.func @transform_0(%arg0: i32) -> (i32, i32, i32, i32) {
    %c0_i32 = arith.constant 0 : i32
    %c0_i32_0 = arith.constant 0 : i32
    %c0_i32_1 = arith.constant 0 : i32
    %c0_i32_2 = arith.constant 0 : i32
    return %arg0, %c0_i32, %c0_i32_0, %c0_i32_1 : i32, i32, i32, i32
  }
  func.func @transform_1(%arg0: i32) -> (i32, i32) {
    %c0_i32 = arith.constant 0 : i32
    %c0_i32_0 = arith.constant 0 : i32
    %c0_i32_1 = arith.constant 0 : i32
    return %c0_i32, %c0_i32_0 : i32, i32
  }
  func.func @transform_2(%arg0: i32) -> (i32, i32) {
    %c0_i32 = arith.constant 0 : i32
    %c0_i32_0 = arith.constant 0 : i32
    %c0_i32_1 = arith.constant 0 : i32
    return %c0_i32, %c0_i32_0 : i32, i32
  }
  func.func @transform_3(%arg0: i32) -> (i32, i32, i32) {
    %c0_i32 = arith.constant 0 : i32
    %c0_i32_0 = arith.constant 0 : i32
    %c0_i32_1 = arith.constant 0 : i32
    %c0_i32_2 = arith.constant 0 : i32
    return %c0_i32, %c0_i32_0, %c0_i32_1 : i32, i32, i32
  }
  func.func @transform_4(%arg0: i32) -> (i32, i32) {
    %c0_i32 = arith.constant 0 : i32
    %c0_i32_0 = arith.constant 0 : i32
    %c0_i32_1 = arith.constant 0 : i32
    return %c0_i32, %c0_i32_0 : i32, i32
  }
  func.func @transform_5(%arg0: i32) -> (i32, i32, i32) {
    %c0_i32 = arith.constant 0 : i32
    %c0_i32_0 = arith.constant 0 : i32
    %c0_i32_1 = arith.constant 0 : i32
    return %arg0, %c0_i32, %c0_i32_0 : i32, i32, i32
  }
}

</mosaic_0001>

<llo_original>
// kernel: encoder_forward_pallas.1
$region0: #{encoder_forward_pallas.1}
  #allocation0 [shape = 'u32[]', space=smem, size = 0x4, offset = 0x4, fixed_abs, tag = 'smem constant byte address 0x4 - core index']
  #allocation1 [shape = 'u32[144,128]{1,0:T(1,128)}', space=vmem, size = 0x12000, scoped, tag = 'internal scratch']
  #allocation2 [shape = 'f32[9,192]{1,0:T(8,128)}', space=vmem, size = 0x4000, scoped, tag = 'scratch operand']
  %s0 = inlined_call_operand.vmem [shape: f32[2,3,9,40], index: 0, kind: input, shape index: {}]
  %s1 = inlined_call_operand.vmem [shape: f32[40,192], index: 1, kind: input, shape index: {}]
  %s2 = inlined_call_operand.vmem [shape: f32[2,192], index: 2, kind: input, shape index: {}]
  %s3 = inlined_call_operand.hbm [shape: f32[5,192,256], index: 3, kind: input, shape index: {}]
  %s4 = inlined_call_operand.vmem [shape: f32[2,256], index: 4, kind: input, shape index: {}]
  %s5 = inlined_call_operand.vmem [shape: f32[2,1,256], index: 5, kind: output, shape index: {}]
  %s6 = sld [smem:[#allocation0]]
  $region57: #{encoder_forward_pallas.1} parent=0
    _
  %s8 = ssub.s32 1, %s6
  %s9 = scalar_select 0, %s8, %s6
  $region1: #{encoder_forward_pallas.1} parent=0
    #allocation3 [shape = 'u8[983040]{0}', space=vmem, size = 0xf0000, scoped, tag = 'input window, operand 3, single buffered']
    #allocation4 [shape = 's32[2]{0}', space=sflag, size = 0x8, scoped, tag = 'scoped memory for encoder_forward_pallas.1']
    %10 = vsyncpa [#allocation4], 0
    loop: start=0, step=1, limit=4
    $region2: #{encoder_forward_pallas.1} parent=1 // loop_pre_header
      _
    $region3: #{encoder_forward_pallas.1} parent=1 // loop_header
      %s12 = sphi 0, %s16
      %p13 = scmp.ge.s32.totalorder %s12, 4
      %s22 = sphi 0, %s24
      %s25 = sphi 0, %s22
      %s26 = sphi 0, %s25
      %s42 = sphi 0, %s26
      %s46 = sphi 0, %s46
      %s48 = sphi 0, %s46
      %s49 = sphi 0, %s48
      %s63 = sphi 0, %s49
      %s67 = sphi 0, %s67
      %s69 = sphi 0, %s67
      %s70 = sphi 0, %s69
      %s84 = sphi 0, %s70
      %s88 = sphi 0, %s88
      %s90 = sphi 0, %s88
      %s91 = sphi 0, %s90
      %s105 = sphi 0, %s91
      %s109 = sphi 0, %s109
      %s111 = sphi 0, %s109
      %s112 = sphi 0, %s111
      %s126 = sphi 0, %s112
      %s132 = sphi 0, %s134
      %s135 = sphi 0, %s132
      %s136 = sphi 0, %s135
      %s152 = sphi 0, %s136
    $region4: #{encoder_forward_pallas.1} parent=1 // loop_header_branch
      %15 = sbr.rel (%p13) target = $region8
    $region5: #{encoder_forward_pallas.1} parent=1 // loop_body
      %s17 = ssub.s32 %s12, 1
      %s18 = ssub.s32 %s12, 2
      %s19 = sadd.s32 %s12, 1
      %s20 = ssub.s32 %s12, %s19
      %p21 = scmp.eq.s32.totalorder %s20, 0
      %s23 = sadd.s32 %s22, 1
      %s24 = scalar_select %p21, %s22, %s23
      %p27 = pneg %p21
      %p28 = scmp.eq.s32.totalorder %s12, 1
      %p29 = por %p27, %p28
      %p30 = scmp.ne.s32.totalorder %s22, %s25
      %p31 = scmp.eq.s32.totalorder %s12, 0
      %p32 = por %p30, %p31
      %p33 = scmp.ne.s32.totalorder %s22, %s25
      %p34 = scmp.eq.s32.totalorder %s17, 1
      %p35 = por %p33, %p34
      %p36 = scmp.ne.s32.totalorder %s25, %s26
      %p37 = scmp.eq.s32.totalorder %s17, 0
      %p38 = por %p36, %p37
      %p39 = scmp.ne.s32.totalorder %s25, %s26
      %p40 = scmp.eq.s32.totalorder %s18, 1
      %p41 = por %p39, %p40
      %p43 = scmp.ne.s32.totalorder %s26, %s42
      %p44 = scmp.eq.s32.totalorder %s18, 0
      %p45 = por %p43, %p44
      %s47 = sadd.s32 %s46, 1
      %p50 = scmp.eq.s32.totalorder %s12, 1
      %p51 = scmp.ne.s32.totalorder %s46, %s48
      %p52 = scmp.eq.s32.totalorder %s12, 0
      %p53 = por %p51, %p52
      %p54 = scmp.ne.s32.totalorder %s46, %s48
      %p55 = scmp.eq.s32.totalorder %s17, 1
      %p56 = por %p54, %p55
      %p57 = scmp.ne.s32.totalorder %s48, %s49
      %p58 = scmp.eq.s32.totalorder %s17, 0
      %p59 = por %p57, %p58
      %p60 = scmp.ne.s32.totalorder %s48, %s49
      %p61 = scmp.eq.s32.totalorder %s18, 1
      %p62 = por %p60, %p61
      %p64 = scmp.ne.s32.totalorder %s49, %s63
      %p65 = scmp.eq.s32.totalorder %s18, 0
      %p66 = por %p64, %p65
      %s68 = sadd.s32 %s67, 1
      %p71 = scmp.eq.s32.totalorder %s12, 1
      %p72 = scmp.ne.s32.totalorder %s67, %s69
      %p73 = scmp.eq.s32.totalorder %s12, 0
      %p74 = por %p72, %p73
      %p75 = scmp.ne.s32.totalorder %s67, %s69
      %p76 = scmp.eq.s32.totalorder %s17, 1
      %p77 = por %p75, %p76
      %p78 = scmp.ne.s32.totalorder %s69, %s70
      %p79 = scmp.eq.s32.totalorder %s17, 0
      %p80 = por %p78, %p79
      %p81 = scmp.ne.s32.totalorder %s69, %s70
      %p82 = scmp.eq.s32.totalorder %s18, 1
      %p83 = por %p81, %p82
      %p85 = scmp.ne.s32.totalorder %s70, %s84
      %p86 = scmp.eq.s32.totalorder %s18, 0
      %p87 = por %p85, %p86
      %s89 = sadd.s32 %s88, 1
      %p92 = scmp.eq.s32.totalorder %s12, 1
      %p93 = scmp.ne.s32.totalorder %s88, %s90
      %p94 = scmp.eq.s32.totalorder %s12, 0
      %p95 = por %p93, %p94
      %p96 = scmp.ne.s32.totalorder %s88, %s90
      %p97 = scmp.eq.s32.totalorder %s17, 1
      %p98 = por %p96, %p97
      %p99 = scmp.ne.s32.totalorder %s90, %s91
      %p100 = scmp.eq.s32.totalorder %s17, 0
      %p101 = por %p99, %p100
      %p102 = scmp.ne.s32.totalorder %s90, %s91
      %p103 = scmp.eq.s32.totalorder %s18, 1
      %p104 = por %p102, %p103
      %p106 = scmp.ne.s32.totalorder %s91, %s105
      %p107 = scmp.eq.s32.totalorder %s18, 0
      %p108 = por %p106, %p107
      %s110 = sadd.s32 %s109, 1
      %p113 = scmp.eq.s32.totalorder %s12, 1
      %p114 = scmp.ne.s32.totalorder %s109, %s111
      %p115 = scmp.eq.s32.totalorder %s12, 0
      %p116 = por %p114, %p115
      %p117 = scmp.ne.s32.totalorder %s109, %s111
      %p118 = scmp.eq.s32.totalorder %s17, 1
      %p119 = por %p117, %p118
      %p120 = scmp.ne.s32.totalorder %s111, %s112
      %p121 = scmp.eq.s32.totalorder %s17, 0
      %p122 = por %p120, %p121
      %p123 = scmp.ne.s32.totalorder %s111, %s112
      %p124 = scmp.eq.s32.totalorder %s18, 1
      %p125 = por %p123, %p124
      %p127 = scmp.ne.s32.totalorder %s112, %s126
      %p128 = scmp.eq.s32.totalorder %s18, 0
      %p129 = por %p127, %p128
      %s130 = ssub.s32 %s12, %s19
      %p131 = scmp.eq.s32.totalorder %s130, 0
      %s133 = sadd.s32 %s132, 1
      %s134 = scalar_select %p131, %s132, %s133
      %p137 = pneg %p131
      %p138 = scmp.eq.s32.totalorder %s12, 1
      %p139 = por %p137, %p138
      %p140 = scmp.ne.s32.totalorder %s132, %s135
      %p141 = scmp.eq.s32.totalorder %s12, 0
      %p142 = por %p140, %p141
      %p143 = scmp.ne.s32.totalorder %s132, %s135
      %p144 = scmp.eq.s32.totalorder %s17, 1
      %p145 = por %p143, %p144
      %p146 = scmp.ne.s32.totalorder %s135, %s136
      %p147 = scmp.eq.s32.totalorder %s17, 0
      %p148 = por %p146, %p147
      %p149 = scmp.ne.s32.totalorder %s135, %s136
      %p150 = scmp.eq.s32.totalorder %s18, 1
      %p151 = por %p149, %p150
      %p153 = scmp.ne.s32.totalorder %s136, %s152
      %p154 = scmp.eq.s32.totalorder %s18, 0
      %p155 = por %p153, %p154
      %p156 = scmp.le.s32.totalorder 1, %s12
      %p157 = scmp.lt.s32.totalorder %s12, 3
      %p158 = pnand %p156, %p157
      %p159 = pneg %p158
      // Predicated region
      $region9: #{encoder_forward_pallas.1} parent=5 // pred_check
        _
      $region10: #{encoder_forward_pallas.1} parent=5 // pred_check_branch
        %161 = sbr.rel (%p158) target = $region12
      $region11: #{encoder_forward_pallas.1} parent=5 // pred_region
        %s162 = ssub.s32 %s12, 1
        // Predicated region
        $region13: #{encoder_forward_pallas.1} parent=11 // pred_check
          %p163 = pneg %p59
        $region14: #{encoder_forward_pallas.1} parent=11 // pred_check_branch
          %165 = sbr.rel (%p163) target = $region16
        $region15: #{encoder_forward_pallas.1} parent=11 // pred_region
          _
        $region16: #{encoder_forward_pallas.1} parent=11 // pred_fallthru
          _
        // Predicated region
        $region17: #{encoder_forward_pallas.1} parent=11 // pred_check
          %p166 = pneg %p80
        $region18: #{encoder_forward_pallas.1} parent=11 // pred_check_branch
          %168 = sbr.rel (%p166) target = $region20
        $region19: #{encoder_forward_pallas.1} parent=11 // pred_region
          _
        $region20: #{encoder_forward_pallas.1} parent=11 // pred_fallthru
          _
        // Predicated region
        $region21: #{encoder_forward_pallas.1} parent=11 // pred_check
          %p169 = pneg %p101
        $region22: #{encoder_forward_pallas.1} parent=11 // pred_check_branch
          %171 = sbr.rel (%p169) target = $region24
        $region23: #{encoder_forward_pallas.1} parent=11 // pred_region
          %s173 = ssub.s32 30720, 30720
          %174 = vsyncadd [#allocation4], %s173
          %s175 = sshll.u32 [#allocation3], 4
          %s176 = int_to_ptr.vmem [resolvable:$true] %s175
          %181 = dma.hbm_to_vmem [thread:$0]  %s3, 30720, %s176, [#allocation4], 256, 256, 16
        $region24: #{encoder_forward_pallas.1} parent=11 // pred_fallthru
          _
        // Predicated region
        $region25: #{encoder_forward_pallas.1} parent=11 // pred_check
          %p182 = pneg %p122
        $region26: #{encoder_forward_pallas.1} parent=11 // pred_check_branch
          %184 = sbr.rel (%p182) target = $region28
        $region27: #{encoder_forward_pallas.1} parent=11 // pred_region
          _
        $region28: #{encoder_forward_pallas.1} parent=11 // pred_fallthru
          _
      $region12: #{encoder_forward_pallas.1} parent=5 // pred_fallthru
        _
      %p185 = scmp.lt.s32.totalorder %s12, 2
      // Predicated region
      $region29: #{encoder_forward_pallas.1} parent=5 // pred_check
        %p186 = pneg %p185
      $region30: #{encoder_forward_pallas.1} parent=5 // pred_check_branch
        %188 = sbr.rel (%p186) target = $region32
      $region31: #{encoder_forward_pallas.1} parent=5 // pred_region
        // Predicated region
        $region33: #{encoder_forward_pallas.1} parent=31 // pred_check
          %p189 = pneg %p32
        $region34: #{encoder_forward_pallas.1} parent=31 // pred_check_branch
          %191 = sbr.rel (%p189) target = $region36
        $region35: #{encoder_forward_pallas.1} parent=31 // pred_region
          %p192 = scmp.lt.s32.totalorder %s12, 1
          %s193 = scalar_select %p192, %s12, 1
          %s194 = smul.addr %s193, 6
          %s195 = smul.addr %s194, 8
          %s196 = scalar_lea.vmem %s0, %s195
        $region36: #{encoder_forward_pallas.1} parent=31 // pred_fallthru
          _
      $region32: #{encoder_forward_pallas.1} parent=5 // pred_fallthru
        _
      %p197 = scmp.le.s32.totalorder 1, %s12
      %p198 = scmp.lt.s32.totalorder %s12, 3
      %p199 = pnand %p197, %p198
      %p200 = pneg %p199
      // Predicated region
      $region37: #{encoder_forward_pallas.1} parent=5 // pred_check
        _
      $region38: #{encoder_forward_pallas.1} parent=5 // pred_check_branch
        %202 = sbr.rel (%p199) target = $region40
      $region39: #{encoder_forward_pallas.1} parent=5 // pred_region
        %s203 = ssub.s32 %s12, 1
        // Predicated region
        $region41: #{encoder_forward_pallas.1} parent=39 // pred_check
          %p204 = pneg %p101
        $region42: #{encoder_forward_pallas.1} parent=39 // pred_check_branch
          %206 = sbr.rel (%p204) target = $region44
        $region43: #{encoder_forward_pallas.1} parent=39 // pred_region
          %207 = dma.done [#allocation4], 30720
        $region44: #{encoder_forward_pallas.1} parent=39 // pred_fallthru
          _
        %p208 = scmp.lt.s32.totalorder %s17, 1
        %s209 = scalar_select %p208, %s17, 1
        %s210 = smul.addr %s209, 6
        %s211 = smul.addr %s210, 8
        %s212 = scalar_lea.vmem %s0, %s211
        %p213 = pneg %p38
        %p214 = pneg %p35
        %p215 = pneg %p59
        %p216 = pneg %p56
        %p217 = pneg %p80
        %p218 = pneg %p77
        %p219 = pneg %p101
        %p220 = pneg %p98
        %p221 = pneg %p122
        %p222 = pneg %p119
        %p223 = pneg %p148
        %p224 = pneg %p145
        %p225 = scmp.lt.s32.totalorder %s17, 1
        %s226 = scalar_select %p225, %s17, 1
        %s227 = smul.addr %s226, 2
        %s228 = scalar_lea.vmem %s5, %s227
        %p229 = scmp.lt.s32.totalorder %s17, 1
        %s230 = scalar_select %p229, %s17, 1
        %s231 = smul.addr %s230, 6
        %s232 = smul.addr %s231, 8
        %s233 = scalar_lea.vmem %s0, %s232
        %p234 = scmp.lt.s32.totalorder %s17, 1
        %s235 = scalar_select %p234, %s17, 1
        %s236 = smul.addr %s235, 2
        %s237 = scalar_lea.vmem %s5, %s236
        %v238 = vld [vmem:[%s2] ss:$2 sm:$0x3]
        %s239 = scalar_lea.vmem %s2, 1
        %v240 = vld [vmem:[%s239] ss:$2 sm:$0x3]
        %v241 = vld [vmem:[%s233] sm:$0xff]
        %v242 = vld [vmem:[%s233 + $0x8] sm:$0x1]
        %v243 = vld [vmem:[%s1] sm:$0xff]
        %v244 = vld [vmem:[%s1 + $0x8] sm:$0xff]
        %v245 = vld [vmem:[%s1 + $0x10] sm:$0xff]
        %v246 = vld [vmem:[%s1 + $0x18] sm:$0xff]
        %v247 = vld [vmem:[%s1 + $0x20] sm:$0xff]
        %v248 = vld [vmem:[%s1 + $0x28] sm:$0xff]
        %v249 = vld [vmem:[%s1 + $0x30] sm:$0xff]
        %v250 = vld [vmem:[%s1 + $0x38] sm:$0xff]
        %v251 = vld [vmem:[%s1 + $0x40] sm:$0xff]
        %v252 = vld [vmem:[%s1 + $0x48] sm:$0xff]
        %v254 = vlaneseq
        %v255 = vshrl.u32 %v254, 7
        %v256 = vsub.s32 0, %v255
        %v257 = vrot.slane %v238, %v256
        %v258 = vlaneseq
        %v259 = vshrl.u32 %v258, 7
        %v260 = vsub.s32 1, %v259
        %v261 = vrot.slane %v238, %v260
        %vm264 = vcmask 326656
        %v266 = vsel %vm264, %v241, 0
        %v269 = vsel %vm264, %v242, 0
        %271 = vmatprep.subr.mxu0 %v244
        %272 = vmatpush1.msra.mxu0 %v243
        %273 = vmatprep.subr.mxu0 %v246
        %274 = vmatpush1.msra.mxu0 %v245
        %275 = vmatprep.subr.mxu0 %v248
        %276 = vmatpush1.msra.mxu0 %v247
        %277 = vmatprep.subr.mxu0 %v250
        %278 = vmatpush1.msra.mxu0 %v249
        %279 = vmatprep.subr.mxu0 %v252
        %280 = vmatpush1.msra.mxu0 %v251
        %281 = vmatprep.subr.mxu0 0.0
        %282 = vmatpush1.msra.mxu0 0.0
        %283 = vmatprep.subr.mxu0 0.0
        %284 = vmatpush1.msra.mxu0 0.0
        %285 = vmatprep.subr.mxu0 0.0
        %286 = vmatpush1.msra.mxu0 0.0
        %287 = vmatprep.subr.mxu0 0.0
        %288 = vmatpush1.msra.mxu0 0.0
        %289 = vmatprep.subr.mxu0 0.0
        %290 = vmatpush1.msra.mxu0 0.0
        %291 = vmatprep.subr.mxu0 0.0
        %292 = vmatpush1.msra.mxu0 0.0
        %293 = vmatprep.subr.mxu0 0.0
        %294 = vmatpush1.msra.mxu0 0.0
        %295 = vmatprep.subr.mxu0 0.0
        %296 = vmatpush1.msra.mxu0 0.0
        %297 = vmatprep.subr.mxu0 0.0
        %298 = vmatpush1.msra.mxu0 0.0
        %299 = vmatprep.subr.mxu0 0.0
        %300 = vmatpush1.msra.mxu0 0.0
        %301 = vmatprep.subr.mxu0 0.0
        %302 = vmatpush1.msra.mxu0 0.0
        %303 = vmatprep.subr.mxu0 0.0
        %304 = vmatpush1.msra.mxu0 0.0
        %305 = vmatprep.subr.mxu0 0.0
        %306 = vmatpush1.msra.mxu0 0.0
        %307 = vmatprep.subr.mxu0 0.0
        %308 = vmatpush1.msra.mxu0 0.0
        %309 = vmatprep.subr.mxu0 0.0
        %310 = vmatpush1.msra.mxu0 0.0
        %311 = vmatprep.subr.mxu0 0.0
        %312 = vmatpush1.msra.mxu0 0.0
        %313 = vmatprep.subr.mxu0 0.0
        %314 = vmatpush1.msra.mxu0 0.0
        %315 = vmatprep.subr.mxu0 0.0
        %316 = vmatpush1.msra.mxu0 0.0
        %317 = vmatprep.subr.mxu0 0.0
        %318 = vmatpush1.msra.mxu0 0.0
        %319 = vmatprep.subr.mxu0 0.0
        %320 = vmatpush1.msra.mxu0 0.0
        %321 = vmatprep.subr.mxu0 0.0
        %322 = vmatpush1.msra.mxu0 0.0
        %323 = vmatprep.subr.mxu0 0.0
        %324 = vmatpush1.msra.mxu0 0.0
        %325 = vmatprep.subr.mxu0 0.0
        %326 = vmatpush1.msra.mxu0 0.0
        %327 = vmatprep.subr.mxu0 0.0
        %328 = vmatpush1.msra.mxu0 0.0
        %329 = vmatprep.subr.mxu0 0.0
        %330 = vmatpush1.msra.mxu0 0.0
        %331 = vmatprep.subr.mxu0 0.0
        %332 = vmatpush1.msra.mxu0 0.0
        %333 = vmatprep.subr.mxu0 0.0
        %334 = vmatpush1.msra.mxu0 0.0
        %335 = vmatprep.mubr.f32.mxu0 0.0
        %336 = vmatmul.mubr.f32.gmra.mrb[0].mxu0 %v266
        %v337 = vpop.f32.mrb[0].mxu0
        %v338 = vadd.f32 %v257, %v337
        %v339 = vpop.f32.mrb[0].mxu0
        %v340 = vadd.f32 %v261, %v339
        %341 = vmatprep.mubr.f32.mxu0 0.0
        %342 = vmatmul.mubr.f32.gmra.mrb[0].mxu0 %v269
        %v343 = vpop.f32.mrb[0].mxu0
        %v344 = vadd.f32 %v257, %v343
        %v345 = vpop.f32.mrb[0].mxu0
        %v346 = vadd.f32 %v261, %v345
        %347 = vdwg.mxu0
        %vm348 = vcmp.ge.f32.partialorder %v338, 0.0
        %vm349 = vcmp.ge.f32.partialorder %v340, 0.0
        %vm350 = vcmp.ge.f32.partialorder %v344, 0.0
        %vm351 = vcmp.ge.f32.partialorder %v346, 0.0
        %v353 = vlaneseq
        %v354 = vshrl.u32 %v353, 7
        %v355 = vsub.s32 0, %v354
        %v356 = vrot.slane %v240, %v355
        %v357 = vlaneseq
        %v358 = vshrl.u32 %v357, 7
        %v359 = vsub.s32 1, %v358
        %v360 = vrot.slane %v240, %v359
        %v363 = vmul.f32 %v356, %v338
        %v364 = vmul.f32 %v360, %v340
        %v365 = vmul.f32 %v356, %v344
        %v366 = vmul.f32 %v360, %v346
        %v367 = vsel %vm348, %v338, %v363
        %v368 = vsel %vm349, %v340, %v364
        %v369 = vsel %vm350, %v344, %v365
        %v370 = vsel %vm351, %v346, %v366
        %s371 = scalar_lea.vmem %s233, 16
        %v372 = vld [vmem:[%s371] sm:$0xff]
        %v373 = vld [vmem:[%s371 + $0x8] sm:$0x1]
        %v375 = vsel %vm264, %v372, 0
        %v378 = vsel %vm264, %v373, 0
        %380 = vmatprep.subr.mxu0 %v244
        %381 = vmatpush1.msra.mxu0 %v243
        %382 = vmatprep.subr.mxu0 %v246
        %383 = vmatpush1.msra.mxu0 %v245
        %384 = vmatprep.subr.mxu0 %v248
        %385 = vmatpush1.msra.mxu0 %v247
        %386 = vmatprep.subr.mxu0 %v250
        %387 = vmatpush1.msra.mxu0 %v249
        %388 = vmatprep.subr.mxu0 %v252
        %389 = vmatpush1.msra.mxu0 %v251
        %390 = vmatprep.subr.mxu0 0.0
        %391 = vmatpush1.msra.mxu0 0.0
        %392 = vmatprep.subr.mxu0 0.0
        %393 = vmatpush1.msra.mxu0 0.0
        %394 = vmatprep.subr.mxu0 0.0
        %395 = vmatpush1.msra.mxu0 0.0
        %396 = vmatprep.subr.mxu0 0.0
        %397 = vmatpush1.msra.mxu0 0.0
        %398 = vmatprep.subr.mxu0 0.0
        %399 = vmatpush1.msra.mxu0 0.0
        %400 = vmatprep.subr.mxu0 0.0
        %401 = vmatpush1.msra.mxu0 0.0
        %402 = vmatprep.subr.mxu0 0.0
        %403 = vmatpush1.msra.mxu0 0.0
        %404 = vmatprep.subr.mxu0 0.0
        %405 = vmatpush1.msra.mxu0 0.0
        %406 = vmatprep.subr.mxu0 0.0
        %407 = vmatpush1.msra.mxu0 0.0
        %408 = vmatprep.subr.mxu0 0.0
        %409 = vmatpush1.msra.mxu0 0.0
        %410 = vmatprep.subr.mxu0 0.0
        %411 = vmatpush1.msra.mxu0 0.0
        %412 = vmatprep.subr.mxu0 0.0
        %413 = vmatpush1.msra.mxu0 0.0
        %414 = vmatprep.subr.mxu0 0.0
        %415 = vmatpush1.msra.mxu0 0.0
        %416 = vmatprep.subr.mxu0 0.0
        %417 = vmatpush1.msra.mxu0 0.0
        %418 = vmatprep.subr.mxu0 0.0
        %419 = vmatpush1.msra.mxu0 0.0
        %420 = vmatprep.subr.mxu0 0.0
        %421 = vmatpush1.msra.mxu0 0.0
        %422 = vmatprep.subr.mxu0 0.0
        %423 = vmatpush1.msra.mxu0 0.0
        %424 = vmatprep.subr.mxu0 0.0
        %425 = vmatpush1.msra.mxu0 0.0
        %426 = vmatprep.subr.mxu0 0.0
        %427 = vmatpush1.msra.mxu0 0.0
        %428 = vmatprep.subr.mxu0 0.0
        %429 = vmatpush1.msra.mxu0 0.0
        %430 = vmatprep.subr.mxu0 0.0
        %431 = vmatpush1.msra.mxu0 0.0
        %432 = vmatprep.subr.mxu0 0.0
        %433 = vmatpush1.msra.mxu0 0.0
        %434 = vmatprep.subr.mxu0 0.0
        %435 = vmatpush1.msra.mxu0 0.0
        %436 = vmatprep.subr.mxu0 0.0
        %437 = vmatpush1.msra.mxu0 0.0
        %438 = vmatprep.subr.mxu0 0.0
        %439 = vmatpush1.msra.mxu0 0.0
        %440 = vmatprep.subr.mxu0 0.0
        %441 = vmatpush1.msra.mxu0 0.0
        %442 = vmatprep.subr.mxu0 0.0
        %443 = vmatpush1.msra.mxu0 0.0
        %444 = vmatprep.mubr.f32.mxu0 0.0
        %445 = vmatmul.mubr.f32.gmra.mrb[0].mxu0 %v375
        %v446 = vpop.f32.mrb[0].mxu0
        %v447 = vadd.f32 %v257, %v446
        %v448 = vpop.f32.mrb[0].mxu0
        %v449 = vadd.f32 %v261, %v448
        %450 = vmatprep.mubr.f32.mxu0 0.0
        %451 = vmatmul.mubr.f32.gmra.mrb[0].mxu0 %v378
        %v452 = vpop.f32.mrb[0].mxu0
        %v453 = vadd.f32 %v257, %v452
        %v454 = vpop.f32.mrb[0].mxu0
        %v455 = vadd.f32 %v261, %v454
        %456 = vdwg.mxu0
        %vm457 = vcmp.ge.f32.partialorder %v447, 0.0
        %vm458 = vcmp.ge.f32.partialorder %v449, 0.0
        %vm459 = vcmp.ge.f32.partialorder %v453, 0.0
        %vm460 = vcmp.ge.f32.partialorder %v455, 0.0
        %v461 = vmul.f32 %v356, %v447
        %v462 = vmul.f32 %v360, %v449
        %v463 = vmul.f32 %v356, %v453
        %v464 = vmul.f32 %v360, %v455
        %v465 = vsel %vm457, %v447, %v461
        %v466 = vsel %vm458, %v449, %v462
        %v467 = vsel %vm459, %v453, %v463
        %v468 = vsel %vm460, %v455, %v464
        %v469 = vmax.f32 %v367, %v465
        %v470 = vmax.f32 %v368, %v466
        %v471 = vmax.f32 %v369, %v467
        %v472 = vmax.f32 %v370, %v468
        %s473 = scalar_lea.vmem %s233, 32
        %v474 = vld [vmem:[%s473] sm:$0xff]
        %v475 = vld [vmem:[%s473 + $0x8] sm:$0x1]
        %v477 = vsel %vm264, %v474, 0
        %v480 = vsel %vm264, %v475, 0
        %482 = vmatprep.subr.mxu0 %v244
        %483 = vmatpush1.msra.mxu0 %v243
        %484 = vmatprep.subr.mxu0 %v246
        %485 = vmatpush1.msra.mxu0 %v245
        %486 = vmatprep.subr.mxu0 %v248
        %487 = vmatpush1.msra.mxu0 %v247
        %488 = vmatprep.subr.mxu0 %v250
        %489 = vmatpush1.msra.mxu0 %v249
        %490 = vmatprep.subr.mxu0 %v252
        %491 = vmatpush1.msra.mxu0 %v251
        %492 = vmatprep.subr.mxu0 0.0
        %493 = vmatpush1.msra.mxu0 0.0
        %494 = vmatprep.subr.mxu0 0.0
        %495 = vmatpush1.msra.mxu0 0.0
        %496 = vmatprep.subr.mxu0 0.0
        %497 = vmatpush1.msra.mxu0 0.0
        %498 = vmatprep.subr.mxu0 0.0
        %499 = vmatpush1.msra.mxu0 0.0
        %500 = vmatprep.subr.mxu0 0.0
        %501 = vmatpush1.msra.mxu0 0.0
        %502 = vmatprep.subr.mxu0 0.0
        %503 = vmatpush1.msra.mxu0 0.0
        %504 = vmatprep.subr.mxu0 0.0
        %505 = vmatpush1.msra.mxu0 0.0
        %506 = vmatprep.subr.mxu0 0.0
        %507 = vmatpush1.msra.mxu0 0.0
        %508 = vmatprep.subr.mxu0 0.0
        %509 = vmatpush1.msra.mxu0 0.0
        %510 = vmatprep.subr.mxu0 0.0
        %511 = vmatpush1.msra.mxu0 0.0
        %512 = vmatprep.subr.mxu0 0.0
        %513 = vmatpush1.msra.mxu0 0.0
        %514 = vmatprep.subr.mxu0 0.0
        %515 = vmatpush1.msra.mxu0 0.0
        %516 = vmatprep.subr.mxu0 0.0
        %517 = vmatpush1.msra.mxu0 0.0
        %518 = vmatprep.subr.mxu0 0.0
        %519 = vmatpush1.msra.mxu0 0.0
        %520 = vmatprep.subr.mxu0 0.0
        %521 = vmatpush1.msra.mxu0 0.0
        %522 = vmatprep.subr.mxu0 0.0
        %523 = vmatpush1.msra.mxu0 0.0
        %524 = vmatprep.subr.mxu0 0.0
        %525 = vmatpush1.msra.mxu0 0.0
        %526 = vmatprep.subr.mxu0 0.0
        %527 = vmatpush1.msra.mxu0 0.0
        %528 = vmatprep.subr.mxu0 0.0
        %529 = vmatpush1.msra.mxu0 0.0
        %530 = vmatprep.subr.mxu0 0.0
        %531 = vmatpush1.msra.mxu0 0.0
        %532 = vmatprep.subr.mxu0 0.0
        %533 = vmatpush1.msra.mxu0 0.0
        %534 = vmatprep.subr.mxu0 0.0
        %535 = vmatpush1.msra.mxu0 0.0
        %536 = vmatprep.subr.mxu0 0.0
        %537 = vmatpush1.msra.mxu0 0.0
        %538 = vmatprep.subr.mxu0 0.0
        %539 = vmatpush1.msra.mxu0 0.0
        %540 = vmatprep.subr.mxu0 0.0
        %541 = vmatpush1.msra.mxu0 0.0
        %542 = vmatprep.subr.mxu0 0.0
        %543 = vmatpush1.msra.mxu0 0.0
        %544 = vmatprep.subr.mxu0 0.0
        %545 = vmatpush1.msra.mxu0 0.0
        %546 = vmatprep.mubr.f32.mxu0 0.0
        %547 = vmatmul.mubr.f32.gmra.mrb[0].mxu0 %v477
        %v548 = vpop.f32.mrb[0].mxu0
        %v549 = vadd.f32 %v257, %v548
        %v550 = vpop.f32.mrb[0].mxu0
        %v551 = vadd.f32 %v261, %v550
        %552 = vmatprep.mubr.f32.mxu0 0.0
        %553 = vmatmul.mubr.f32.gmra.mrb[0].mxu0 %v480
        %v554 = vpop.f32.mrb[0].mxu0
        %v555 = vadd.f32 %v257, %v554
        %v556 = vpop.f32.mrb[0].mxu0
        %v557 = vadd.f32 %v261, %v556
        %558 = vdwg.mxu0
        %vm559 = vcmp.ge.f32.partialorder %v549, 0.0
        %vm560 = vcmp.ge.f32.partialorder %v551, 0.0
        %vm561 = vcmp.ge.f32.partialorder %v555, 0.0
        %vm562 = vcmp.ge.f32.partialorder %v557, 0.0
        %v563 = vmul.f32 %v356, %v549
        %v564 = vmul.f32 %v360, %v551
        %v565 = vmul.f32 %v356, %v555
        %v566 = vmul.f32 %v360, %v557
        %v567 = vsel %vm559, %v549, %v563
        %v568 = vsel %vm560, %v551, %v564
        %v569 = vsel %vm561, %v555, %v565
        %v570 = vsel %vm562, %v557, %v566
        %v571 = vmax.f32 %v469, %v567
        %v572 = vmax.f32 %v470, %v568
        %v573 = vmax.f32 %v471, %v569
        %v574 = vmax.f32 %v472, %v570
        %575 = vst [vmem:[#allocation2] sm:$0xff] %v571
        %vm576 = vcmask 523264
        %577 = vst.msk [vmem:[#allocation2 + $0x8] sm:$0xff] %vm576, %v572
        %578 = vst [vmem:[#allocation2 + $0x10] sm:$0x1] %v573
        %vm579 = vcmask 516096
        %580 = vst.msk [vmem:[#allocation2 + $0x18] sm:$0x1] %vm579, %v574
        %v581 = vld [vmem:[%s4] ss:$2 sm:$0x3]
        %s582 = scalar_lea.vmem %s4, 1
        %v583 = vld [vmem:[%s582] ss:$2 sm:$0x3]
        %v584 = vld [vmem:[#allocation2] sm:$0x7]
        %v585 = vld [vmem:[#allocation2 + $0x8] sm:$0x7]
        %v586 = vld [vmem:[#allocation3] sm:$0xff]
        %v587 = vld [vmem:[#allocation3 + $0x8] sm:$0xff]
        %v588 = vld [vmem:[#allocation3 + $0x10] sm:$0xff]
        %v589 = vld [vmem:[#allocation3 + $0x18] sm:$0xff]
        %v590 = vld [vmem:[#allocation3 + $0x20] sm:$0xff]
        %v591 = vld [vmem:[#allocation3 + $0x28] sm:$0xff]
        %v592 = vld [vmem:[#allocation3 + $0x30] sm:$0xff]
        %v593 = vld [vmem:[#allocation3 + $0x38] sm:$0xff]
        %v594 = vld [vmem:[#allocation3 + $0x40] sm:$0xff]
        %v595 = vld [vmem:[#allocation3 + $0x48] sm:$0xff]
        %v596 = vld [vmem:[#allocation3 + $0x50] sm:$0xff]
        %v597 = vld [vmem:[#allocation3 + $0x58] sm:$0xff]
        %v598 = vld [vmem:[#allocation3 + $0x60] sm:$0xff]
        %v599 = vld [vmem:[#allocation3 + $0x68] sm:$0xff]
        %v600 = vld [vmem:[#allocation3 + $0x70] sm:$0xff]
        %v601 = vld [vmem:[#allocation3 + $0x78] sm:$0xff]
        %v602 = vld [vmem:[#allocation3 + $0x80] sm:$0xff]
        %v603 = vld [vmem:[#allocation3 + $0x88] sm:$0xff]
        %v604 = vld [vmem:[#allocation3 + $0x90] sm:$0xff]
        %v605 = vld [vmem:[#allocation3 + $0x98] sm:$0xff]
        %v606 = vld [vmem:[#allocation3 + $0xa0] sm:$0xff]
        %v607 = vld [vmem:[#allocation3 + $0xa8] sm:$0xff]
        %v608 = vld [vmem:[#allocation3 + $0xb0] sm:$0xff]
        %v609 = vld [vmem:[#allocation3 + $0xb8] sm:$0xff]
        %v610 = vld [vmem:[#allocation3 + $0xc0] sm:$0xff]
        %v611 = vld [vmem:[#allocation3 + $0xc8] sm:$0xff]
        %v612 = vld [vmem:[#allocation3 + $0xd0] sm:$0xff]
        %v613 = vld [vmem:[#allocation3 + $0xd8] sm:$0xff]
        %v614 = vld [vmem:[#allocation3 + $0xe0] sm:$0xff]
        %v615 = vld [vmem:[#allocation3 + $0xe8] sm:$0xff]
        %v616 = vld [vmem:[#allocation3 + $0xf0] sm:$0xff]
        %v617 = vld [vmem:[#allocation3 + $0xf8] sm:$0xff]
        %v618 = vld [vmem:[#allocation3 + $0x100] sm:$0xff]
        %v619 = vld [vmem:[#allocation3 + $0x108] sm:$0xff]
        %v620 = vld [vmem:[#allocation3 + $0x110] sm:$0xff]
        %v621 = vld [vmem:[#allocation3 + $0x118] sm:$0xff]
        %v622 = vld [vmem:[#allocation3 + $0x120] sm:$0xff]
        %v623 = vld [vmem:[#allocation3 + $0x128] sm:$0xff]
        %v624 = vld [vmem:[#allocation3 + $0x130] sm:$0xff]
        %v625 = vld [vmem:[#allocation3 + $0x138] sm:$0xff]
        %v626 = vld [vmem:[#allocation3 + $0x140] sm:$0xff]
        %v627 = vld [vmem:[#allocation3 + $0x148] sm:$0xff]
        %v628 = vld [vmem:[#allocation3 + $0x150] sm:$0xff]
        %v629 = vld [vmem:[#allocation3 + $0x158] sm:$0xff]
        %v630 = vld [vmem:[#allocation3 + $0x160] sm:$0xff]
        %v631 = vld [vmem:[#allocation3 + $0x168] sm:$0xff]
        %v632 = vld [vmem:[#allocation3 + $0x170] sm:$0xff]
        %v633 = vld [vmem:[#allocation3 + $0x178] sm:$0xff]
        %v634 = vld [vmem:[#allocation2] sm:$0xe]
        %v635 = vld [vmem:[#allocation2 + $0x8] sm:$0xe]
        %s636 = scalar_lea.vmem [#allocation3], 384
        %v637 = vld [vmem:[%s636] sm:$0xff]
        %v638 = vld [vmem:[%s636 + $0x8] sm:$0xff]
        %v639 = vld [vmem:[%s636 + $0x10] sm:$0xff]
        %v640 = vld [vmem:[%s636 + $0x18] sm:$0xff]
        %v641 = vld [vmem:[%s636 + $0x20] sm:$0xff]
        %v642 = vld [vmem:[%s636 + $0x28] sm:$0xff]
        %v643 = vld [vmem:[%s636 + $0x30] sm:$0xff]
        %v644 = vld [vmem:[%s636 + $0x38] sm:$0xff]
        %v645 = vld [vmem:[%s636 + $0x40] sm:$0xff]
        %v646 = vld [vmem:[%s636 + $0x48] sm:$0xff]
        %v647 = vld [vmem:[%s636 + $0x50] sm:$0xff]
        %v648 = vld [vmem:[%s636 + $0x58] sm:$0xff]
        %v649 = vld [vmem:[%s636 + $0x60] sm:$0xff]
        %v650 = vld [vmem:[%s636 + $0x68] sm:$0xff]
        %v651 = vld [vmem:[%s636 + $0x70] sm:$0xff]
        %v652 = vld [vmem:[%s636 + $0x78] sm:$0xff]
        %v653 = vld [vmem:[%s636 + $0x80] sm:$0xff]
        %v654 = vld [vmem:[%s636 + $0x88] sm:$0xff]
        %v655 = vld [vmem:[%s636 + $0x90] sm:$0xff]
        %v656 = vld [vmem:[%s636 + $0x98] sm:$0xff]
        %v657 = vld [vmem:[%s636 + $0xa0] sm:$0xff]
        %v658 = vld [vmem:[%s636 + $0xa8] sm:$0xff]
        %v659 = vld [vmem:[%s636 + $0xb0] sm:$0xff]
        %v660 = vld [vmem:[%s636 + $0xb8] sm:$0xff]
        %v661 = vld [vmem:[%s636 + $0xc0] sm:$0xff]
        %v662 = vld [vmem:[%s636 + $0xc8] sm:$0xff]
        %v663 = vld [vmem:[%s636 + $0xd0] sm:$0xff]
        %v664 = vld [vmem:[%s636 + $0xd8] sm:$0xff]
        %v665 = vld [vmem:[%s636 + $0xe0] sm:$0xff]
        %v666 = vld [vmem:[%s636 + $0xe8] sm:$0xff]
        %v667 = vld [vmem:[%s636 + $0xf0] sm:$0xff]
        %v668 = vld [vmem:[%s636 + $0xf8] sm:$0xff]
        %v669 = vld [vmem:[%s636 + $0x100] sm:$0xff]
        %v670 = vld [vmem:[%s636 + $0x108] sm:$0xff]
        %v671 = vld [vmem:[%s636 + $0x110] sm:$0xff]
        %v672 = vld [vmem:[%s636 + $0x118] sm:$0xff]
        %v673 = vld [vmem:[%s636 + $0x120] sm:$0xff]
        %v674 = vld [vmem:[%s636 + $0x128] sm:$0xff]
        %v675 = vld [vmem:[%s636 + $0x130] sm:$0xff]
        %v676 = vld [vmem:[%s636 + $0x138] sm:$0xff]
        %v677 = vld [vmem:[%s636 + $0x140] sm:$0xff]
        %v678 = vld [vmem:[%s636 + $0x148] sm:$0xff]
        %v679 = vld [vmem:[%s636 + $0x150] sm:$0xff]
        %v680 = vld [vmem:[%s636 + $0x158] sm:$0xff]
        %v681 = vld [vmem:[%s636 + $0x160] sm:$0xff]
        %v682 = vld [vmem:[%s636 + $0x168] sm:$0xff]
        %v683 = vld [vmem:[%s636 + $0x170] sm:$0xff]
        %v684 = vld [vmem:[%s636 + $0x178] sm:$0xff]
        %v687 = vrot.slane %v634, 1
        %v688 = vrot.slane %v635, 1
        %v690 = vsel %vm576, %v688, 0
        %692 = vmatprep.subr.mxu0 %v638
        %693 = vmatpush1.msra.mxu0 %v637
        %694 = vmatprep.subr.mxu0 %v640
        %695 = vmatpush1.msra.mxu0 %v639
        %696 = vmatprep.subr.mxu0 %v642
        %697 = vmatpush1.msra.mxu0 %v641
        %698 = vmatprep.subr.mxu0 %v644
        %699 = vmatpush1.msra.mxu0 %v643
        %700 = vmatprep.subr.mxu0 %v646
        %701 = vmatpush1.msra.mxu0 %v645
        %702 = vmatprep.subr.mxu0 %v648
        %703 = vmatpush1.msra.mxu0 %v647
        %704 = vmatprep.subr.mxu0 %v650
        %705 = vmatpush1.msra.mxu0 %v649
        %706 = vmatprep.subr.mxu0 %v652
        %707 = vmatpush1.msra.mxu0 %v651
        %708 = vmatprep.subr.mxu0 %v654
        %709 = vmatpush1.msra.mxu0 %v653
        %710 = vmatprep.subr.mxu0 %v656
        %711 = vmatpush1.msra.mxu0 %v655
        %712 = vmatprep.subr.mxu0 %v658
        %713 = vmatpush1.msra.mxu0 %v657
        %714 = vmatprep.subr.mxu0 %v660
        %715 = vmatpush1.msra.mxu0 %v659
        %716 = vmatprep.subr.mxu0 %v662
        %717 = vmatpush1.msra.mxu0 %v661
        %718 = vmatprep.subr.mxu0 %v664
        %719 = vmatpush1.msra.mxu0 %v663
        %720 = vmatprep.subr.mxu0 %v666
        %721 = vmatpush1.msra.mxu0 %v665
        %722 = vmatprep.subr.mxu0 %v668
        %723 = vmatpush1.msra.mxu0 %v667
        %724 = vmatprep.subr.mxu0 %v670
        %725 = vmatpush1.msra.mxu0 %v669
        %726 = vmatprep.subr.mxu0 %v672
        %727 = vmatpush1.msra.mxu0 %v671
        %728 = vmatprep.subr.mxu0 %v674
        %729 = vmatpush1.msra.mxu0 %v673
        %730 = vmatprep.subr.mxu0 %v676
        %731 = vmatpush1.msra.mxu0 %v675
        %732 = vmatprep.subr.mxu0 %v678
        %733 = vmatpush1.msra.mxu0 %v677
        %734 = vmatprep.subr.mxu0 %v680
        %735 = vmatpush1.msra.mxu0 %v679
        %736 = vmatprep.subr.mxu0 %v682
        %737 = vmatpush1.msra.mxu0 %v681
        %738 = vmatprep.subr.mxu0 %v684
        %739 = vmatpush1.msra.mxu0 %v683
        %740 = vmatprep.subr.mxu0 0.0
        %741 = vmatpush1.msra.mxu0 0.0
        %742 = vmatprep.subr.mxu0 0.0
        %743 = vmatpush1.msra.mxu0 0.0
        %744 = vmatprep.subr.mxu0 0.0
        %745 = vmatpush1.msra.mxu0 0.0
        %746 = vmatprep.subr.mxu0 0.0
        %747 = vmatpush1.msra.mxu0 0.0
        %748 = vmatprep.subr.mxu0 0.0
        %749 = vmatpush1.msra.mxu0 0.0
        %750 = vmatprep.subr.mxu0 0.0
        %751 = vmatpush1.msra.mxu0 0.0
        %752 = vmatprep.subr.mxu0 0.0
        %753 = vmatpush1.msra.mxu0 0.0
        %754 = vmatprep.subr.mxu0 0.0
        %755 = vmatpush1.msra.mxu0 0.0
        %756 = vmatprep.mubr.f32.mxu0 %v690
        %757 = vmatmul.mubr.f32.gmra.mrb[0].mxu0 %v687
        %v758 = vpop.f32.mrb[0].mxu0
        %v759 = vadd.f32 0.0, %v758
        %v760 = vpop.f32.mrb[0].mxu0
        %v761 = vadd.f32 0.0, %v760
        %762 = vdwg.mxu0
        %v764 = vsel %vm576, %v585, 0
        %766 = vmatprep.subr.mxu0 %v587
        %767 = vmatpush1.msra.mxu0 %v586
        %768 = vmatprep.subr.mxu0 %v589
        %769 = vmatpush1.msra.mxu0 %v588
        %770 = vmatprep.subr.mxu0 %v591
        %771 = vmatpush1.msra.mxu0 %v590
        %772 = vmatprep.subr.mxu0 %v593
        %773 = vmatpush1.msra.mxu0 %v592
        %774 = vmatprep.subr.mxu0 %v595
        %775 = vmatpush1.msra.mxu0 %v594
        %776 = vmatprep.subr.mxu0 %v597
        %777 = vmatpush1.msra.mxu0 %v596
        %778 = vmatprep.subr.mxu0 %v599
        %779 = vmatpush1.msra.mxu0 %v598
        %780 = vmatprep.subr.mxu0 %v601
        %781 = vmatpush1.msra.mxu0 %v600
        %782 = vmatprep.subr.mxu0 %v603
        %783 = vmatpush1.msra.mxu0 %v602
        %784 = vmatprep.subr.mxu0 %v605
        %785 = vmatpush1.msra.mxu0 %v604
        %786 = vmatprep.subr.mxu0 %v607
        %787 = vmatpush1.msra.mxu0 %v606
        %788 = vmatprep.subr.mxu0 %v609
        %789 = vmatpush1.msra.mxu0 %v608
        %790 = vmatprep.subr.mxu0 %v611
        %791 = vmatpush1.msra.mxu0 %v610
        %792 = vmatprep.subr.mxu0 %v613
        %793 = vmatpush1.msra.mxu0 %v612
        %794 = vmatprep.subr.mxu0 %v615
        %795 = vmatpush1.msra.mxu0 %v614
        %796 = vmatprep.subr.mxu0 %v617
        %797 = vmatpush1.msra.mxu0 %v616
        %798 = vmatprep.subr.mxu0 %v619
        %799 = vmatpush1.msra.mxu0 %v618
        %800 = vmatprep.subr.mxu0 %v621
        %801 = vmatpush1.msra.mxu0 %v620
        %802 = vmatprep.subr.mxu0 %v623
        %803 = vmatpush1.msra.mxu0 %v622
        %804 = vmatprep.subr.mxu0 %v625
        %805 = vmatpush1.msra.mxu0 %v624
        %806 = vmatprep.subr.mxu0 %v627
        %807 = vmatpush1.msra.mxu0 %v626
        %808 = vmatprep.subr.mxu0 %v629
        %809 = vmatpush1.msra.mxu0 %v628
        %810 = vmatprep.subr.mxu0 %v631
        %811 = vmatpush1.msra.mxu0 %v630
        %812 = vmatprep.subr.mxu0 %v633
        %813 = vmatpush1.msra.mxu0 %v632
        %814 = vmatprep.subr.mxu0 0.0
        %815 = vmatpush1.msra.mxu0 0.0
        %816 = vmatprep.subr.mxu0 0.0
        %817 = vmatpush1.msra.mxu0 0.0
        %818 = vmatprep.subr.mxu0 0.0
        %819 = vmatpush1.msra.mxu0 0.0
        %820 = vmatprep.subr.mxu0 0.0
        %821 = vmatpush1.msra.mxu0 0.0
        %822 = vmatprep.subr.mxu0 0.0
        %823 = vmatpush1.msra.mxu0 0.0
        %824 = vmatprep.subr.mxu0 0.0
        %825 = vmatpush1.msra.mxu0 0.0
        %826 = vmatprep.subr.mxu0 0.0
        %827 = vmatpush1.msra.mxu0 0.0
        %828 = vmatprep.subr.mxu0 0.0
        %829 = vmatpush1.msra.mxu0 0.0
        %830 = vmatprep.mubr.f32.mxu0 %v764
        %831 = vmatmul.mubr.f32.gmra.mrb[0].mxu0 %v584
        %v832 = vpop.f32.mrb[0].mxu0
        %v833 = vadd.f32 %v759, %v832
        %v834 = vpop.f32.mrb[0].mxu0
        %v835 = vadd.f32 %v761, %v834
        %836 = vdwg.mxu0
        %v837 = vld [vmem:[#allocation2] sm:$0x1c]
        %v838 = vld [vmem:[#allocation2 + $0x8] sm:$0x1c]
        %s839 = scalar_lea.vmem [#allocation3], 768
        %v840 = vld [vmem:[%s839] sm:$0xff]
        %v841 = vld [vmem:[%s839 + $0x8] sm:$0xff]
        %v842 = vld [vmem:[%s839 + $0x10] sm:$0xff]
        %v843 = vld [vmem:[%s839 + $0x18] sm:$0xff]
        %v844 = vld [vmem:[%s839 + $0x20] sm:$0xff]
        %v845 = vld [vmem:[%s839 + $0x28] sm:$0xff]
        %v846 = vld [vmem:[%s839 + $0x30] sm:$0xff]
        %v847 = vld [vmem:[%s839 + $0x38] sm:$0xff]
        %v848 = vld [vmem:[%s839 + $0x40] sm:$0xff]
        %v849 = vld [vmem:[%s839 + $0x48] sm:$0xff]
        %v850 = vld [vmem:[%s839 + $0x50] sm:$0xff]
        %v851 = vld [vmem:[%s839 + $0x58] sm:$0xff]
        %v852 = vld [vmem:[%s839 + $0x60] sm:$0xff]
        %v853 = vld [vmem:[%s839 + $0x68] sm:$0xff]
        %v854 = vld [vmem:[%s839 + $0x70] sm:$0xff]
        %v855 = vld [vmem:[%s839 + $0x78] sm:$0xff]
        %v856 = vld [vmem:[%s839 + $0x80] sm:$0xff]
        %v857 = vld [vmem:[%s839 + $0x88] sm:$0xff]
        %v858 = vld [vmem:[%s839 + $0x90] sm:$0xff]
        %v859 = vld [vmem:[%s839 + $0x98] sm:$0xff]
        %v860 = vld [vmem:[%s839 + $0xa0] sm:$0xff]
        %v861 = vld [vmem:[%s839 + $0xa8] sm:$0xff]
        %v862 = vld [vmem:[%s839 + $0xb0] sm:$0xff]
        %v863 = vld [vmem:[%s839 + $0xb8] sm:$0xff]
        %v864 = vld [vmem:[%s839 + $0xc0] sm:$0xff]
        %v865 = vld [vmem:[%s839 + $0xc8] sm:$0xff]
        %v866 = vld [vmem:[%s839 + $0xd0] sm:$0xff]
        %v867 = vld [vmem:[%s839 + $0xd8] sm:$0xff]
        %v868 = vld [vmem:[%s839 + $0xe0] sm:$0xff]
        %v869 = vld [vmem:[%s839 + $0xe8] sm:$0xff]
        %v870 = vld [vmem:[%s839 + $0xf0] sm:$0xff]
        %v871 = vld [vmem:[%s839 + $0xf8] sm:$0xff]
        %v872 = vld [vmem:[%s839 + $0x100] sm:$0xff]
        %v873 = vld [vmem:[%s839 + $0x108] sm:$0xff]
        %v874 = vld [vmem:[%s839 + $0x110] sm:$0xff]
        %v875 = vld [vmem:[%s839 + $0x118] sm:$0xff]
        %v876 = vld [vmem:[%s839 + $0x120] sm:$0xff]
        %v877 = vld [vmem:[%s839 + $0x128] sm:$0xff]
        %v878 = vld [vmem:[%s839 + $0x130] sm:$0xff]
        %v879 = vld [vmem:[%s839 + $0x138] sm:$0xff]
        %v880 = vld [vmem:[%s839 + $0x140] sm:$0xff]
        %v881 = vld [vmem:[%s839 + $0x148] sm:$0xff]
        %v882 = vld [vmem:[%s839 + $0x150] sm:$0xff]
        %v883 = vld [vmem:[%s839 + $0x158] sm:$0xff]
        %v884 = vld [vmem:[%s839 + $0x160] sm:$0xff]
        %v885 = vld [vmem:[%s839 + $0x168] sm:$0xff]
        %v886 = vld [vmem:[%s839 + $0x170] sm:$0xff]
        %v887 = vld [vmem:[%s839 + $0x178] sm:$0xff]
        %v890 = vrot.slane %v837, 2
        %v891 = vrot.slane %v838, 2
        %v893 = vsel %vm576, %v891, 0
        %895 = vmatprep.subr.mxu0 %v841
        %896 = vmatpush1.msra.mxu0 %v840
        %897 = vmatprep.subr.mxu0 %v843
        %898 = vmatpush1.msra.mxu0 %v842
        %899 = vmatprep.subr.mxu0 %v845
        %900 = vmatpush1.msra.mxu0 %v844
        %901 = vmatprep.subr.mxu0 %v847
        %902 = vmatpush1.msra.mxu0 %v846
        %903 = vmatprep.subr.mxu0 %v849
        %904 = vmatpush1.msra.mxu0 %v848
        %905 = vmatprep.subr.mxu0 %v851
        %906 = vmatpush1.msra.mxu0 %v850
        %907 = vmatprep.subr.mxu0 %v853
        %908 = vmatpush1.msra.mxu0 %v852
        %909 = vmatprep.subr.mxu0 %v855
        %910 = vmatpush1.msra.mxu0 %v854
        %911 = vmatprep.subr.mxu0 %v857
        %912 = vmatpush1.msra.mxu0 %v856
        %913 = vmatprep.subr.mxu0 %v859
        %914 = vmatpush1.msra.mxu0 %v858
        %915 = vmatprep.subr.mxu0 %v861
        %916 = vmatpush1.msra.mxu0 %v860
        %917 = vmatprep.subr.mxu0 %v863
        %918 = vmatpush1.msra.mxu0 %v862
        %919 = vmatprep.subr.mxu0 %v865
        %920 = vmatpush1.msra.mxu0 %v864
        %921 = vmatprep.subr.mxu0 %v867
        %922 = vmatpush1.msra.mxu0 %v866
        %923 = vmatprep.subr.mxu0 %v869
        %924 = vmatpush1.msra.mxu0 %v868
        %925 = vmatprep.subr.mxu0 %v871
        %926 = vmatpush1.msra.mxu0 %v870
        %927 = vmatprep.subr.mxu0 %v873
        %928 = vmatpush1.msra.mxu0 %v872
        %929 = vmatprep.subr.mxu0 %v875
        %930 = vmatpush1.msra.mxu0 %v874
        %931 = vmatprep.subr.mxu0 %v877
        %932 = vmatpush1.msra.mxu0 %v876
        %933 = vmatprep.subr.mxu0 %v879
        %934 = vmatpush1.msra.mxu0 %v878
        %935 = vmatprep.subr.mxu0 %v881
        %936 = vmatpush1.msra.mxu0 %v880
        %937 = vmatprep.subr.mxu0 %v883
        %938 = vmatpush1.msra.mxu0 %v882
        %939 = vmatprep.subr.mxu0 %v885
        %940 = vmatpush1.msra.mxu0 %v884
        %941 = vmatprep.subr.mxu0 %v887
        %942 = vmatpush1.msra.mxu0 %v886
        %943 = vmatprep.subr.mxu0 0.0
        %944 = vmatpush1.msra.mxu0 0.0
        %945 = vmatprep.subr.mxu0 0.0
        %946 = vmatpush1.msra.mxu0 0.0
        %947 = vmatprep.subr.mxu0 0.0
        %948 = vmatpush1.msra.mxu0 0.0
        %949 = vmatprep.subr.mxu0 0.0
        %950 = vmatpush1.msra.mxu0 0.0
        %951 = vmatprep.subr.mxu0 0.0
        %952 = vmatpush1.msra.mxu0 0.0
        %953 = vmatprep.subr.mxu0 0.0
        %954 = vmatpush1.msra.mxu0 0.0
        %955 = vmatprep.subr.mxu0 0.0
        %956 = vmatpush1.msra.mxu0 0.0
        %957 = vmatprep.subr.mxu0 0.0
        %958 = vmatpush1.msra.mxu0 0.0
        %959 = vmatprep.mubr.f32.mxu0 %v893
        %960 = vmatmul.mubr.f32.gmra.mrb[0].mxu0 %v890
        %v961 = vpop.f32.mrb[0].mxu0
        %v962 = vadd.f32 0.0, %v961
        %v963 = vpop.f32.mrb[0].mxu0
        %v964 = vadd.f32 0.0, %v963
        %965 = vdwg.mxu0
        %v966 = vadd.f32 %v833, %v962
        %v967 = vadd.f32 %v835, %v964
        %v968 = vld [vmem:[#allocation2] sm:$0x38]
        %v969 = vld [vmem:[#allocation2 + $0x8] sm:$0x38]
        %s970 = scalar_lea.vmem [#allocation3], 1152
        %v971 = vld [vmem:[%s970] sm:$0xff]
        %v972 = vld [vmem:[%s970 + $0x8] sm:$0xff]
        %v973 = vld [vmem:[%s970 + $0x10] sm:$0xff]
        %v974 = vld [vmem:[%s970 + $0x18] sm:$0xff]
        %v975 = vld [vmem:[%s970 + $0x20] sm:$0xff]
        %v976 = vld [vmem:[%s970 + $0x28] sm:$0xff]
        %v977 = vld [vmem:[%s970 + $0x30] sm:$0xff]
        %v978 = vld [vmem:[%s970 + $0x38] sm:$0xff]
        %v979 = vld [vmem:[%s970 + $0x40] sm:$0xff]
        %v980 = vld [vmem:[%s970 + $0x48] sm:$0xff]
        %v981 = vld [vmem:[%s970 + $0x50] sm:$0xff]
        %v982 = vld [vmem:[%s970 + $0x58] sm:$0xff]
        %v983 = vld [vmem:[%s970 + $0x60] sm:$0xff]
        %v984 = vld [vmem:[%s970 + $0x68] sm:$0xff]
        %v985 = vld [vmem:[%s970 + $0x70] sm:$0xff]
        %v986 = vld [vmem:[%s970 + $0x78] sm:$0xff]
        %v987 = vld [vmem:[%s970 + $0x80] sm:$0xff]
        %v988 = vld [vmem:[%s970 + $0x88] sm:$0xff]
        %v989 = vld [vmem:[%s970 + $0x90] sm:$0xff]
        %v990 = vld [vmem:[%s970 + $0x98] sm:$0xff]
        %v991 = vld [vmem:[%s970 + $0xa0] sm:$0xff]
        %v992 = vld [vmem:[%s970 + $0xa8] sm:$0xff]
        %v993 = vld [vmem:[%s970 + $0xb0] sm:$0xff]
        %v994 = vld [vmem:[%s970 + $0xb8] sm:$0xff]
        %v995 = vld [vmem:[%s970 + $0xc0] sm:$0xff]
        %v996 = vld [vmem:[%s970 + $0xc8] sm:$0xff]
        %v997 = vld [vmem:[%s970 + $0xd0] sm:$0xff]
        %v998 = vld [vmem:[%s970 + $0xd8] sm:$0xff]
        %v999 = vld [vmem:[%s970 + $0xe0] sm:$0xff]
        %v1000 = vld [vmem:[%s970 + $0xe8] sm:$0xff]
        %v1001 = vld [vmem:[%s970 + $0xf0] sm:$0xff]
        %v1002 = vld [vmem:[%s970 + $0xf8] sm:$0xff]
        %v1003 = vld [vmem:[%s970 + $0x100] sm:$0xff]
        %v1004 = vld [vmem:[%s970 + $0x108] sm:$0xff]
        %v1005 = vld [vmem:[%s970 + $0x110] sm:$0xff]
        %v1006 = vld [vmem:[%s970 + $0x118] sm:$0xff]
        %v1007 = vld [vmem:[%s970 + $0x120] sm:$0xff]
        %v1008 = vld [vmem:[%s970 + $0x128] sm:$0xff]
        %v1009 = vld [vmem:[%s970 + $0x130] sm:$0xff]
        %v1010 = vld [vmem:[%s970 + $0x138] sm:$0xff]
        %v1011 = vld [vmem:[%s970 + $0x140] sm:$0xff]
        %v1012 = vld [vmem:[%s970 + $0x148] sm:$0xff]
        %v1013 = vld [vmem:[%s970 + $0x150] sm:$0xff]
        %v1014 = vld [vmem:[%s970 + $0x158] sm:$0xff]
        %v1015 = vld [vmem:[%s970 + $0x160] sm:$0xff]
        %v1016 = vld [vmem:[%s970 + $0x168] sm:$0xff]
        %v1017 = vld [vmem:[%s970 + $0x170] sm:$0xff]
        %v1018 = vld [vmem:[%s970 + $0x178] sm:$0xff]
        %v1021 = vrot.slane %v968, 3
        %v1022 = vrot.slane %v969, 3
        %v1024 = vsel %vm576, %v1022, 0
        %1026 = vmatprep.subr.mxu0 %v972
        %1027 = vmatpush1.msra.mxu0 %v971
        %1028 = vmatprep.subr.mxu0 %v974
        %1029 = vmatpush1.msra.mxu0 %v973
        %1030 = vmatprep.subr.mxu0 %v976
        %1031 = vmatpush1.msra.mxu0 %v975
        %1032 = vmatprep.subr.mxu0 %v978
        %1033 = vmatpush1.msra.mxu0 %v977
        %1034 = vmatprep.subr.mxu0 %v980
        %1035 = vmatpush1.msra.mxu0 %v979
        %1036 = vmatprep.subr.mxu0 %v982
        %1037 = vmatpush1.msra.mxu0 %v981
        %1038 = vmatprep.subr.mxu0 %v984
        %1039 = vmatpush1.msra.mxu0 %v983
        %1040 = vmatprep.subr.mxu0 %v986
        %1041 = vmatpush1.msra.mxu0 %v985
        %1042 = vmatprep.subr.mxu0 %v988
        %1043 = vmatpush1.msra.mxu0 %v987
        %1044 = vmatprep.subr.mxu0 %v990
        %1045 = vmatpush1.msra.mxu0 %v989
        %1046 = vmatprep.subr.mxu0 %v992
        %1047 = vmatpush1.msra.mxu0 %v991
        %1048 = vmatprep.subr.mxu0 %v994
        %1049 = vmatpush1.msra.mxu0 %v993
        %1050 = vmatprep.subr.mxu0 %v996
        %1051 = vmatpush1.msra.mxu0 %v995
        %1052 = vmatprep.subr.mxu0 %v998
        %1053 = vmatpush1.msra.mxu0 %v997
        %1054 = vmatprep.subr.mxu0 %v1000
        %1055 = vmatpush1.msra.mxu0 %v999
        %1056 = vmatprep.subr.mxu0 %v1002
        %1057 = vmatpush1.msra.mxu0 %v1001
        %1058 = vmatprep.subr.mxu0 %v1004
        %1059 = vmatpush1.msra.mxu0 %v1003
        %1060 = vmatprep.subr.mxu0 %v1006
        %1061 = vmatpush1.msra.mxu0 %v1005
        %1062 = vmatprep.subr.mxu0 %v1008
        %1063 = vmatpush1.msra.mxu0 %v1007
        %1064 = vmatprep.subr.mxu0 %v1010
        %1065 = vmatpush1.msra.mxu0 %v1009
        %1066 = vmatprep.subr.mxu0 %v1012
        %1067 = vmatpush1.msra.mxu0 %v1011
        %1068 = vmatprep.subr.mxu0 %v1014
        %1069 = vmatpush1.msra.mxu0 %v1013
        %1070 = vmatprep.subr.mxu0 %v1016
        %1071 = vmatpush1.msra.mxu0 %v1015
        %1072 = vmatprep.subr.mxu0 %v1018
        %1073 = vmatpush1.msra.mxu0 %v1017
        %1074 = vmatprep.subr.mxu0 0.0
        %1075 = vmatpush1.msra.mxu0 0.0
        %1076 = vmatprep.subr.mxu0 0.0
        %1077 = vmatpush1.msra.mxu0 0.0
        %1078 = vmatprep.subr.mxu0 0.0
        %1079 = vmatpush1.msra.mxu0 0.0
        %1080 = vmatprep.subr.mxu0 0.0
        %1081 = vmatpush1.msra.mxu0 0.0
        %1082 = vmatprep.subr.mxu0 0.0
        %1083 = vmatpush1.msra.mxu0 0.0
        %1084 = vmatprep.subr.mxu0 0.0
        %1085 = vmatpush1.msra.mxu0 0.0
        %1086 = vmatprep.subr.mxu0 0.0
        %1087 = vmatpush1.msra.mxu0 0.0
        %1088 = vmatprep.subr.mxu0 0.0
        %1089 = vmatpush1.msra.mxu0 0.0
        %1090 = vmatprep.mubr.f32.mxu0 %v1024
        %1091 = vmatmul.mubr.f32.gmra.mrb[0].mxu0 %v1021
        %v1092 = vpop.f32.mrb[0].mxu0
        %v1093 = vadd.f32 0.0, %v1092
        %v1094 = vpop.f32.mrb[0].mxu0
        %v1095 = vadd.f32 0.0, %v1094
        %1096 = vdwg.mxu0
        %v1097 = vadd.f32 %v966, %v1093
        %v1098 = vadd.f32 %v967, %v1095
        %v1099 = vld [vmem:[#allocation2] sm:$0x70]
        %v1100 = vld [vmem:[#allocation2 + $0x8] sm:$0x70]
        %s1101 = scalar_lea.vmem [#allocation3], 1536
        %v1102 = vld [vmem:[%s1101] sm:$0xff]
        %v1103 = vld [vmem:[%s1101 + $0x8] sm:$0xff]
        %v1104 = vld [vmem:[%s1101 + $0x10] sm:$0xff]
        %v1105 = vld [vmem:[%s1101 + $0x18] sm:$0xff]
        %v1106 = vld [vmem:[%s1101 + $0x20] sm:$0xff]
        %v1107 = vld [vmem:[%s1101 + $0x28] sm:$0xff]
        %v1108 = vld [vmem:[%s1101 + $0x30] sm:$0xff]
        %v1109 = vld [vmem:[%s1101 + $0x38] sm:$0xff]
        %v1110 = vld [vmem:[%s1101 + $0x40] sm:$0xff]
        %v1111 = vld [vmem:[%s1101 + $0x48] sm:$0xff]
        %v1112 = vld [vmem:[%s1101 + $0x50] sm:$0xff]
        %v1113 = vld [vmem:[%s1101 + $0x58] sm:$0xff]
        %v1114 = vld [vmem:[%s1101 + $0x60] sm:$0xff]
        %v1115 = vld [vmem:[%s1101 + $0x68] sm:$0xff]
        %v1116 = vld [vmem:[%s1101 + $0x70] sm:$0xff]
        %v1117 = vld [vmem:[%s1101 + $0x78] sm:$0xff]
        %v1118 = vld [vmem:[%s1101 + $0x80] sm:$0xff]
        %v1119 = vld [vmem:[%s1101 + $0x88] sm:$0xff]
        %v1120 = vld [vmem:[%s1101 + $0x90] sm:$0xff]
        %v1121 = vld [vmem:[%s1101 + $0x98] sm:$0xff]
        %v1122 = vld [vmem:[%s1101 + $0xa0] sm:$0xff]
        %v1123 = vld [vmem:[%s1101 + $0xa8] sm:$0xff]
        %v1124 = vld [vmem:[%s1101 + $0xb0] sm:$0xff]
        %v1125 = vld [vmem:[%s1101 + $0xb8] sm:$0xff]
        %v1126 = vld [vmem:[%s1101 + $0xc0] sm:$0xff]
        %v1127 = vld [vmem:[%s1101 + $0xc8] sm:$0xff]
        %v1128 = vld [vmem:[%s1101 + $0xd0] sm:$0xff]
        %v1129 = vld [vmem:[%s1101 + $0xd8] sm:$0xff]
        %v1130 = vld [vmem:[%s1101 + $0xe0] sm:$0xff]
        %v1131 = vld [vmem:[%s1101 + $0xe8] sm:$0xff]
        %v1132 = vld [vmem:[%s1101 + $0xf0] sm:$0xff]
        %v1133 = vld [vmem:[%s1101 + $0xf8] sm:$0xff]
        %v1134 = vld [vmem:[%s1101 + $0x100] sm:$0xff]
        %v1135 = vld [vmem:[%s1101 + $0x108] sm:$0xff]
        %v1136 = vld [vmem:[%s1101 + $0x110] sm:$0xff]
        %v1137 = vld [vmem:[%s1101 + $0x118] sm:$0xff]
        %v1138 = vld [vmem:[%s1101 + $0x120] sm:$0xff]
        %v1139 = vld [vmem:[%s1101 + $0x128] sm:$0xff]
        %v1140 = vld [vmem:[%s1101 + $0x130] sm:$0xff]
        %v1141 = vld [vmem:[%s1101 + $0x138] sm:$0xff]
        %v1142 = vld [vmem:[%s1101 + $0x140] sm:$0xff]
        %v1143 = vld [vmem:[%s1101 + $0x148] sm:$0xff]
        %v1144 = vld [vmem:[%s1101 + $0x150] sm:$0xff]
        %v1145 = vld [vmem:[%s1101 + $0x158] sm:$0xff]
        %v1146 = vld [vmem:[%s1101 + $0x160] sm:$0xff]
        %v1147 = vld [vmem:[%s1101 + $0x168] sm:$0xff]
        %v1148 = vld [vmem:[%s1101 + $0x170] sm:$0xff]
        %v1149 = vld [vmem:[%s1101 + $0x178] sm:$0xff]
        %v1152 = vrot.slane %v1099, 4
        %v1153 = vrot.slane %v1100, 4
        %v1155 = vsel %vm576, %v1153, 0
        %1157 = vmatprep.subr.mxu0 %v1103
        %1158 = vmatpush1.msra.mxu0 %v1102
        %1159 = vmatprep.subr.mxu0 %v1105
        %1160 = vmatpush1.msra.mxu0 %v1104
        %1161 = vmatprep.subr.mxu0 %v1107
        %1162 = vmatpush1.msra.mxu0 %v1106
        %1163 = vmatprep.subr.mxu0 %v1109
        %1164 = vmatpush1.msra.mxu0 %v1108
        %1165 = vmatprep.subr.mxu0 %v1111
        %1166 = vmatpush1.msra.mxu0 %v1110
        %1167 = vmatprep.subr.mxu0 %v1113
        %1168 = vmatpush1.msra.mxu0 %v1112
        %1169 = vmatprep.subr.mxu0 %v1115
        %1170 = vmatpush1.msra.mxu0 %v1114
        %1171 = vmatprep.subr.mxu0 %v1117
        %1172 = vmatpush1.msra.mxu0 %v1116
        %1173 = vmatprep.subr.mxu0 %v1119
        %1174 = vmatpush1.msra.mxu0 %v1118
        %1175 = vmatprep.subr.mxu0 %v1121
        %1176 = vmatpush1.msra.mxu0 %v1120
        %1177 = vmatprep.subr.mxu0 %v1123
        %1178 = vmatpush1.msra.mxu0 %v1122
        %1179 = vmatprep.subr.mxu0 %v1125
        %1180 = vmatpush1.msra.mxu0 %v1124
        %1181 = vmatprep.subr.mxu0 %v1127
        %1182 = vmatpush1.msra.mxu0 %v1126
        %1183 = vmatprep.subr.mxu0 %v1129
        %1184 = vmatpush1.msra.mxu0 %v1128
        %1185 = vmatprep.subr.mxu0 %v1131
        %1186 = vmatpush1.msra.mxu0 %v1130
        %1187 = vmatprep.subr.mxu0 %v1133
        %1188 = vmatpush1.msra.mxu0 %v1132
        %1189 = vmatprep.subr.mxu0 %v1135
        %1190 = vmatpush1.msra.mxu0 %v1134
        %1191 = vmatprep.subr.mxu0 %v1137
        %1192 = vmatpush1.msra.mxu0 %v1136
        %1193 = vmatprep.subr.mxu0 %v1139
        %1194 = vmatpush1.msra.mxu0 %v1138
        %1195 = vmatprep.subr.mxu0 %v1141
        %1196 = vmatpush1.msra.mxu0 %v1140
        %1197 = vmatprep.subr.mxu0 %v1143
        %1198 = vmatpush1.msra.mxu0 %v1142
        %1199 = vmatprep.subr.mxu0 %v1145
        %1200 = vmatpush1.msra.mxu0 %v1144
        %1201 = vmatprep.subr.mxu0 %v1147
        %1202 = vmatpush1.msra.mxu0 %v1146
        %1203 = vmatprep.subr.mxu0 %v1149
        %1204 = vmatpush1.msra.mxu0 %v1148
        %1205 = vmatprep.subr.mxu0 0.0
        %1206 = vmatpush1.msra.mxu0 0.0
        %1207 = vmatprep.subr.mxu0 0.0
        %1208 = vmatpush1.msra.mxu0 0.0
        %1209 = vmatprep.subr.mxu0 0.0
        %1210 = vmatpush1.msra.mxu0 0.0
        %1211 = vmatprep.subr.mxu0 0.0
        %1212 = vmatpush1.msra.mxu0 0.0
        %1213 = vmatprep.subr.mxu0 0.0
        %1214 = vmatpush1.msra.mxu0 0.0
        %1215 = vmatprep.subr.mxu0 0.0
        %1216 = vmatpush1.msra.mxu0 0.0
        %1217 = vmatprep.subr.mxu0 0.0
        %1218 = vmatpush1.msra.mxu0 0.0
        %1219 = vmatprep.subr.mxu0 0.0
        %1220 = vmatpush1.msra.mxu0 0.0
        %1221 = vmatprep.mubr.f32.mxu0 %v1155
        %1222 = vmatmul.mubr.f32.gmra.mrb[0].mxu0 %v1152
        %v1223 = vpop.f32.mrb[0].mxu0
        %v1224 = vadd.f32 0.0, %v1223
        %v1225 = vpop.f32.mrb[0].mxu0
        %v1226 = vadd.f32 0.0, %v1225
        %1227 = vdwg.mxu0
        %v1228 = vadd.f32 %v1097, %v1224
        %v1229 = vadd.f32 %v1098, %v1226
        %v1231 = vlaneseq
        %v1232 = vshrl.u32 %v1231, 7
        %v1233 = vsub.s32 0, %v1232
        %v1234 = vrot.slane %v581, %v1233
        %v1235 = vlaneseq
        %v1236 = vshrl.u32 %v1235, 7
        %v1237 = vsub.s32 1, %v1236
        %v1238 = vrot.slane %v581, %v1237
        %v1241 = vadd.f32 %v1228, %v1234
        %v1242 = vadd.f32 %v1229, %v1238
        %vm1243 = vcmp.ge.f32.partialorder %v1241, 0.0
        %vm1244 = vcmp.ge.f32.partialorder %v1242, 0.0
        %v1246 = vlaneseq
        %v1247 = vshrl.u32 %v1246, 7
        %v1248 = vsub.s32 0, %v1247
        %v1249 = vrot.slane %v583, %v1248
        %v1250 = vlaneseq
        %v1251 = vshrl.u32 %v1250, 7
        %v1252 = vsub.s32 1, %v1251
        %v1253 = vrot.slane %v583, %v1252
        %v1256 = vmul.f32 %v1249, %v1241
        %v1257 = vmul.f32 %v1253, %v1242
        %v1258 = vsel %vm1243, %v1241, %v1256
        %v1259 = vsel %vm1244, %v1242, %v1257
        %v1262 = vrot.slane %v1258, 1
        %v1263 = vrot.slane %v1259, 1
        %v1266 = vmax.f32 %v1258, %v1262
        %v1267 = vmax.f32 %v1259, %v1263
        %v1268 = vrot.slane %v1258, 2
        %v1269 = vrot.slane %v1259, 2
        %v1272 = vmax.f32 %v1266, %v1268
        %v1273 = vmax.f32 %v1267, %v1269
        %v1276 = vcombine.low %v1272, %v1273
        %v1278 = vunpack.c.l.s4 1966171168
        %v1279 = vunpack.c.0.s8 %v1278
        %v1280 = vlaneseq
        %v1281 = vshrl.u32 %v1280, 7
        %v1282 = vsub.s32 %v1279, %v1281
        %v1283 = vrot.slane %v1276, %v1282
        %v1285 = vunpack.c.l.s4 1966171168
        %v1286 = vunpack.c.0.s8 %v1285
        %v1287 = vlaneseq
        %v1288 = vshrl.u32 %v1287, 7
        %v1289 = vsub.s32 %v1286, %v1288
        %v1290 = vrot.slane %v1283, %v1289
        %v1292 = vlaneseq
        %vm1293 = vcmp.ge.s32.totalorder %v1292, 0
        %vm1294 = vcmp.lt.s32.totalorder %v1292, 256
        %vm1295 = vmand %vm1293, %vm1294
        %1296 = vst.msk [vmem:[%s237] sm:$0x3] %vm1295, %v1290
        %p1297 = scmp.lt.s32.totalorder %s17, 1
        %s1298 = scalar_select %p1297, %s17, 1
        %s1299 = smul.addr %s1298, 2
        %s1300 = scalar_lea.vmem %s5, %s1299
        // Predicated region
        $region45: #{encoder_forward_pallas.1} parent=39 // pred_check
          %p1301 = pneg %p145
        $region46: #{encoder_forward_pallas.1} parent=39 // pred_check_branch
          %1303 = sbr.rel (%p1301) target = $region48
        $region47: #{encoder_forward_pallas.1} parent=39 // pred_region
          _
        $region48: #{encoder_forward_pallas.1} parent=39 // pred_fallthru
          _
      $region40: #{encoder_forward_pallas.1} parent=5 // pred_fallthru
        _
      %p1304 = scmp.le.s32.totalorder 2, %s12
      // Predicated region
      $region49: #{encoder_forward_pallas.1} parent=5 // pred_check
        %p1305 = pneg %p1304
      $region50: #{encoder_forward_pallas.1} parent=5 // pred_check_branch
        %1307 = sbr.rel (%p1305) target = $region52
      $region51: #{encoder_forward_pallas.1} parent=5 // pred_region
        %s1308 = ssub.s32 %s12, 2
        // Predicated region
        $region53: #{encoder_forward_pallas.1} parent=51 // pred_check
          %p1309 = pneg %p151
        $region54: #{encoder_forward_pallas.1} parent=51 // pred_check_branch
          %1311 = sbr.rel (%p1309) target = $region56
        $region55: #{encoder_forward_pallas.1} parent=51 // pred_region
          %p1312 = scmp.lt.s32.totalorder %s18, 1
          %s1313 = scalar_select %p1312, %s18, 1
          %s1314 = smul.addr %s1313, 2
          %s1315 = scalar_lea.vmem %s5, %s1314
        $region56: #{encoder_forward_pallas.1} parent=51 // pred_fallthru
          _
      $region52: #{encoder_forward_pallas.1} parent=5 // pred_fallthru
        _
    $region6: #{encoder_forward_pallas.1} parent=1 // loop_footer
      %s16 = sadd.s32 1, %s12
    $region7: #{encoder_forward_pallas.1} parent=1 // loop_footer_branch
      %11 = sbr.rel target = $region3
    $region8: #{encoder_forward_pallas.1} parent=1 // loop_exit
      _
    %1316 = vsyncpa [#allocation4], 1
    %s1317 = scalar_lea.sflag [#allocation4], 1
    %1318 = vsyncpa %s1317, 1

</llo_original>
